<compile_context>
chip_gen: v7x
topology: tpu7x:2x2x1
jax: 0.10.0
libtpu: 0.0.40
codegen_flags: <defaults>
</compile_context>

<pallas_src>
import math
from functools import partial

import jax
import jax.numpy as jnp
from jax.experimental import pallas as pl
from jax.experimental.pallas import tpu as pltpu

K = 2            # number of propagation rounds (module default)
USE_RELU = True  # module default


def _act(v):
    return jnp.maximum(v, 0.0) if USE_RELU else v


def h2gcn_kernel(x_ref, a12_ref, we_ref, wc_ref, out_ref, *act_refs,
                 hidden, k, class_dim, tile):
    r = pl.program_id(0)                       # round: 0 .. k
    i = pl.program_id(1)                       # row tile
    row0 = pl.multiple_of(i * tile, tile)
    rows = pl.ds(row0, tile)

    # ---- round 0: embed + first classify contribution -----------------------
    @pl.when(r == 0)
    def _embed():
        h = jnp.dot(x_ref[...], we_ref[...], preferred_element_type=jnp.float32)
        h = _act(h).astype(jnp.bfloat16)
        act_refs[0][rows, :] = h
        out_ref[rows, :] = jnp.dot(h, wc_ref[0:hidden, :],
                                   preferred_element_type=jnp.float32)

    # ---- rounds 1..k: propagation (+ fused classify, softmax at the end) ----
    for rr in range(1, k + 1):
        w_prev = hidden * (1 << (rr - 1))            # width of round rr-1 block
        wc_off = hidden * ((1 << rr) - 1)            # row offset into w_classify

        def _prop(rr=rr, w_prev=w_prev, wc_off=wc_off):
            prev = act_refs[rr - 1][...]             # (N, w_prev) bf16, all tiles
            # one wide matmul: [a1_tile; a2_tile] @ prev -> (2*tile, w_prev)
            r12 = jnp.dot(a12_ref[...], prev, preferred_element_type=jnp.float32)
            r1 = _act(r12[:tile, :])
            r2 = _act(r12[tile:, :])
            cur = jnp.concatenate([r1, r2], axis=1).astype(jnp.bfloat16)
            if rr < k:                               # last round is never re-read
                act_refs[rr][rows, :] = cur
            contrib = jnp.dot(cur, wc_ref[wc_off:wc_off + 2 * w_prev, :],
                              preferred_element_type=jnp.float32)
            logits = out_ref[rows, :] + contrib      # out block is the f32 accum
            if rr < k:
                out_ref[rows, :] = logits
            else:
                # TODO(synk): training-mode dropout (F.dropout) not implemented
                # (identity in eval mode, matching module.eval()).
                col = jax.lax.broadcasted_iota(jnp.int32, logits.shape, 1)
                logits = jnp.where(col < class_dim, logits, -1e30)  # mask pads
                m = jnp.max(logits, axis=1, keepdims=True)
                e = jnp.exp(logits - m)
                inv = pl.reciprocal(jnp.sum(e, axis=1, keepdims=True), approx=True)
                out_ref[rows, :] = e * inv

        pl.when(r == rr)(_prop)


def h2gcn_forward(x, a1n, a2n, w_embed, w_classify, *, k=K, tile=128):
    n, feat = x.shape
    hidden = w_embed.shape[1]
    class_dim = w_classify.shape[1]
    wc_rows = (2 ** (k + 1) - 1) * hidden
    assert k >= 1
    assert w_classify.shape[0] == wc_rows
    tile = min(tile, n)
    assert n % tile == 0, "n must be divisible by the row tile"
    n_tiles = n // tile
    c_pad = ((class_dim + 127) // 128) * 128     # lane-dense output width

    # bf16 operands for the MXU (f32 accumulation happens inside the kernel).
    xb = x.astype(jnp.bfloat16)
    web = w_embed.astype(jnp.bfloat16)
    wcb = jnp.pad(w_classify, ((0, 0), (0, c_pad - class_dim))).astype(jnp.bfloat16)
    # Interleave a1 / a2 row tiles: block i = [a1 rows of tile i ; a2 rows of tile i].
    a1b = a1n.astype(jnp.bfloat16).reshape(n_tiles, tile, n)
    a2b = a2n.astype(jnp.bfloat16).reshape(n_tiles, tile, n)
    a12 = jnp.concatenate([a1b, a2b], axis=1).reshape(2 * n, n)

    # Conditional index maps: Pallas skips the DMA when the block index does not
    # change between consecutive grid steps, so:
    #   * x is streamed only during round 0 (pinned to the last tile afterwards),
    #   * a12 is streamed only during rounds 1..k (pinned to block 0 in round 0).
    def x_map(r, i):
        return (jnp.where(r == 0, i, n_tiles - 1), 0)

    def a12_map(r, i):
        return (jnp.where(r == 0, 0, i), 0)

    out = pl.pallas_call(
        partial(h2gcn_kernel, hidden=hidden, k=k, class_dim=class_dim, tile=tile),
        out_shape=jax.ShapeDtypeStruct((n, c_pad), jnp.float32),
        grid_spec=pltpu.PrefetchScalarGridSpec(
            num_scalar_prefetch=0,
            grid=(k + 1, n_tiles),                  # rounds outer, row tiles inner
            in_specs=[
                pl.BlockSpec((tile, feat), x_map),                   # x
                pl.BlockSpec((2 * tile, n), a12_map),                # [a1;a2] tile
                pl.BlockSpec((feat, hidden), lambda r, i: (0, 0)),   # w_embed
                pl.BlockSpec((wc_rows, c_pad), lambda r, i: (0, 0)), # w_classify
            ],
            out_specs=pl.BlockSpec((n, c_pad), lambda r, i: (0, 0)), # resident acc
            scratch_shapes=[pltpu.VMEM((n, hidden * (1 << rr)), jnp.bfloat16)
                            for rr in range(k)],
        ),
        compiler_params=pltpu.CompilerParams(
            # tile axis must be sequential: later rounds read all tiles' scratch
            dimension_semantics=("arbitrary", "arbitrary"),
            vmem_limit_bytes=48 * 1024 * 1024,
        ),
    )(xb, a12, web, wcb)
    return out[:, :class_dim]


# ----------------------- plain-JAX graph preprocessing -----------------------

def _adj_norm_dense(a):
    d = jnp.sum(a, axis=1)
    d_inv_sqrt = jnp.power(d, -0.5)
    d_inv_sqrt = jnp.where(jnp.isinf(d_inv_sqrt), 0.0, d_inv_sqrt)
    return d_inv_sqrt[:, None] * a * d_inv_sqrt[None, :]


def prepare_prop(adj):
    """Dense equivalent of H2GCN_ORIGINIAL._prepare_prop."""
    n = adj.shape[0]
    eye = jnp.eye(n, dtype=adj.dtype)
    a1 = jnp.where(adj - eye > 0, 1.0, 0.0).astype(jnp.float32)
    two_hop = adj @ adj - adj - eye
    a2 = jnp.where(two_hop > 0, 1.0, 0.0).astype(jnp.float32)
    return _adj_norm_dense(a1), _adj_norm_dense(a2)


def xavier_uniform(key, shape):
    fan_in, fan_out = shape
    bound = math.sqrt(6.0 / (fan_in + fan_out))
    return jax.random.uniform(key, shape, jnp.float32, minval=-bound, maxval=bound)


def h2gcn_reference(x, a1n, a2n, we, wc, k=K):
    """Pure-JAX f32 reference matching the PyTorch forward (eval mode)."""
    rs = [_act(x @ we)]
    for _ in range(k):
        r = rs[-1]
        rs.append(_act(jnp.concatenate([a1n @ r, a2n @ r], axis=1)))
    r_final = jnp.concatenate(rs, axis=1)
    return jax.nn.softmax(r_final @ wc, axis=1)


# ------------------------------------ main -----------------------------------

if __name__ == "__main__":
    N, FEAT, HIDDEN, CLASS = 256, 128, 64, 4
    TILE = 128

    key = jax.random.PRNGKey(0)
    k_x, k_adj, k_we, k_wc = jax.random.split(key, 4)

    # node features
    x = jax.random.normal(k_x, (N, FEAT), dtype=jnp.float32)

    # random symmetric 0/1 adjacency with self loops (~4-5% density)
    raw = jax.random.uniform(k_adj, (N, N))
    sym = ((raw + raw.T) * 0.5 > 0.85).astype(jnp.float32)
    adj = jnp.maximum(sym, jnp.eye(N, dtype=jnp.float32))

    # parameters (xavier_uniform, deterministic)
    w_embed = xavier_uniform(k_we, (FEAT, HIDDEN))
    w_classify = xavier_uniform(k_wc, ((2 ** (K + 1) - 1) * HIDDEN, CLASS))

    a1n, a2n = prepare_prop(adj)

    out = h2gcn_forward(x, a1n, a2n, w_embed, w_classify, k=K, tile=TILE)
    out = jax.block_until_ready(out)

    ref = h2gcn_reference(x, a1n, a2n, w_embed, w_classify, k=K)

    assert out.shape == (N, CLASS)
    assert bool(jnp.all(jnp.isfinite(out)))
    assert bool(jnp.allclose(jnp.sum(out, axis=1), 1.0, atol=1e-2))
    max_err = float(jnp.max(jnp.abs(out - ref)))
    assert max_err < 6e-2, f"max abs error vs f32 reference: {max_err}"
    print("KERNEL_OK")
</pallas_src>

<mosaic_0001>
module attributes {stable_mosaic.version = 11 : i64} {
  func.func @h2gcn_kernel(%arg0: i32, %arg1: i32, %arg2: memref<128x128xbf16, #tpu.memory_space<vmem>>, %arg3: memref<256x256xbf16, #tpu.memory_space<vmem>>, %arg4: memref<128x64xbf16, #tpu.memory_space<vmem>>, %arg5: memref<448x128xbf16, #tpu.memory_space<vmem>>, %arg6: memref<256x128xf32, #tpu.memory_space<vmem>>, %arg7: memref<256x64xbf16, #tpu.memory_space<vmem>>, %arg8: memref<256x128xbf16, #tpu.memory_space<vmem>>) attributes {dimension_semantics = [#tpu.dimension_semantics<arbitrary>, #tpu.dimension_semantics<arbitrary>], iteration_bounds = array<i64: 3, 2>, scalar_prefetch = 0 : i64, scratch_operands = 2 : i64, tpu.core_type = #tpu.core_type<tc>, window_params = [{transform_indices = @transform_0, window_bounds = array<i64: 128, 128>}, {transform_indices = @transform_1, window_bounds = array<i64: 256, 256>}, {pipeline_mode = #tpu.pipeline_mode<synchronous>, transform_indices = @transform_2, window_bounds = array<i64: 128, 64>}, {pipeline_mode = #tpu.pipeline_mode<synchronous>, transform_indices = @transform_3, window_bounds = array<i64: 448, 128>}, {pipeline_mode = #tpu.pipeline_mode<synchronous>, transform_indices = @transform_4, window_bounds = array<i64: 256, 128>}]} {
    %c128_i32 = arith.constant 128 : i32
    %0 = arith.muli %arg1, %c128_i32 : i32
    %1 = tpu.assume_multiple %0, 128 : i32
    %c0_i32 = arith.constant 0 : i32
    %2 = arith.cmpi eq, %arg0, %c0_i32 : i32
    %3 = arith.extui %2 : i1 to i32
    %c0_i32_0 = arith.constant 0 : i32
    %4 = arith.cmpi ne, %3, %c0_i32_0 : i32
    scf.if %4 {
      %c0 = arith.constant 0 : index
      %c0_3 = arith.constant 0 : index
      %11 = vector.load %arg2[%c0, %c0_3] : memref<128x128xbf16, #tpu.memory_space<vmem>>, vector<128x128xbf16>
      %c0_4 = arith.constant 0 : index
      %c0_5 = arith.constant 0 : index
      %12 = vector.load %arg4[%c0_4, %c0_5] : memref<128x64xbf16, #tpu.memory_space<vmem>>, vector<128x64xbf16>
      %cst = arith.constant dense<0.000000e+00> : vector<128x64xf32>
      %13 = tpu.matmul %11, %12, %cst {dimension_numbers = #tpu.dot_dimension_numbers<[1], [0], [0], [1], [0, 0, 1, 1], [], []>} : vector<128x128xbf16>, vector<128x64xbf16>, vector<128x64xf32> -> vector<128x64xf32>
      %cst_6 = arith.constant 0.000000e+00 : f32
      %14 = vector.broadcast %cst_6 : f32 to vector<128x64xf32>
      %15 = arith.maximumf %13, %14 : vector<128x64xf32>
      %16 = arith.truncf %15 : vector<128x64xf32> to vector<128x64xbf16>
      %17 = arith.index_cast %1 : i32 to index
      %c0_7 = arith.constant 0 : index
      %18 = vector.load %arg7[%17, %c0_7] : memref<256x64xbf16, #tpu.memory_space<vmem>>, vector<128x64xbf16>
      tpu.vector_store %arg7[%17, %c0_7], %16 {strides = array<i32>} : memref<256x64xbf16, #tpu.memory_space<vmem>>, vector<128x64xbf16>,
      %c0_8 = arith.constant 0 : index
      %c0_9 = arith.constant 0 : index
      %19 = vector.load %arg5[%c0_8, %c0_9] : memref<448x128xbf16, #tpu.memory_space<vmem>>, vector<64x128xbf16>
      %cst_10 = arith.constant dense<0.000000e+00> : vector<128x128xf32>
      %20 = tpu.matmul %16, %19, %cst_10 {dimension_numbers = #tpu.dot_dimension_numbers<[1], [0], [0], [1], [0, 0, 1, 1], [], []>} : vector<128x64xbf16>, vector<64x128xbf16>, vector<128x128xf32> -> vector<128x128xf32>
      %21 = arith.index_cast %1 : i32 to index
      %c0_11 = arith.constant 0 : index
      %22 = vector.load %arg6[%21, %c0_11] : memref<256x128xf32, #tpu.memory_space<vmem>>, vector<128x128xf32>
      tpu.vector_store %arg6[%21, %c0_11], %20 {strides = array<i32>} : memref<256x128xf32, #tpu.memory_space<vmem>>, vector<128x128xf32>,
    } else {
    }
    %c1_i32 = arith.constant 1 : i32
    %5 = arith.cmpi eq, %arg0, %c1_i32 : i32
    %6 = arith.extui %5 : i1 to i32
    %c0_i32_1 = arith.constant 0 : i32
    %7 = arith.cmpi ne, %6, %c0_i32_1 : i32
    scf.if %7 {
      %c0 = arith.constant 0 : index
      %c0_3 = arith.constant 0 : index
      %11 = vector.load %arg7[%c0, %c0_3] : memref<256x64xbf16, #tpu.memory_space<vmem>>, vector<256x64xbf16>
      %c0_4 = arith.constant 0 : index
      %c0_5 = arith.constant 0 : index
      %12 = vector.load %arg3[%c0_4, %c0_5] : memref<256x256xbf16, #tpu.memory_space<vmem>>, vector<256x256xbf16>
      %cst = arith.constant dense<0.000000e+00> : vector<256x64xf32>
      %13 = tpu.matmul %12, %11, %cst {dimension_numbers = #tpu.dot_dimension_numbers<[1], [0], [0], [1], [0, 0, 1, 1], [], []>} : vector<256x256xbf16>, vector<256x64xbf16>, vector<256x64xf32> -> vector<256x64xf32>
      %14 = vector.extract_strided_slice %13 {offsets = [0, 0], sizes = [128, 64], strides = [1, 1]} : vector<256x64xf32> to vector<128x64xf32>
      %cst_6 = arith.constant 0.000000e+00 : f32
      %15 = vector.broadcast %cst_6 : f32 to vector<128x64xf32>
      %16 = arith.maximumf %14, %15 : vector<128x64xf32>
      %17 = vector.extract_strided_slice %13 {offsets = [128, 0], sizes = [128, 64], strides = [1, 1]} : vector<256x64xf32> to vector<128x64xf32>
      %cst_7 = arith.constant 0.000000e+00 : f32
      %18 = vector.broadcast %cst_7 : f32 to vector<128x64xf32>
      %19 = arith.maximumf %17, %18 : vector<128x64xf32>
      %20 = tpu.concatenate %16, %19 in 1 : vector<128x64xf32>, vector<128x64xf32> -> vector<128x128xf32>
      %21 = arith.truncf %20 : vector<128x128xf32> to vector<128x128xbf16>
      %22 = arith.index_cast %1 : i32 to index
      %c0_8 = arith.constant 0 : index
      %23 = vector.load %arg8[%22, %c0_8] : memref<256x128xbf16, #tpu.memory_space<vmem>>, vector<128x128xbf16>
      tpu.vector_store %arg8[%22, %c0_8], %21 {strides = array<i32>} : memref<256x128xbf16, #tpu.memory_space<vmem>>, vector<128x128xbf16>,
      %c64 = arith.constant 64 : index
      %c0_9 = arith.constant 0 : index
      %24 = vector.load %arg5[%c64, %c0_9] : memref<448x128xbf16, #tpu.memory_space<vmem>>, vector<128x128xbf16>
      %cst_10 = arith.constant dense<0.000000e+00> : vector<128x128xf32>
      %25 = tpu.matmul %21, %24, %cst_10 {dimension_numbers = #tpu.dot_dimension_numbers<[1], [0], [0], [1], [0, 0, 1, 1], [], []>} : vector<128x128xbf16>, vector<128x128xbf16>, vector<128x128xf32> -> vector<128x128xf32>
      %26 = arith.index_cast %1 : i32 to index
      %c0_11 = arith.constant 0 : index
      %27 = vector.load %arg6[%26, %c0_11] : memref<256x128xf32, #tpu.memory_space<vmem>>, vector<128x128xf32>
      %28 = arith.addf %27, %25 : vector<128x128xf32>
      %29 = arith.index_cast %1 : i32 to index
      %c0_12 = arith.constant 0 : index
      %30 = vector.load %arg6[%29, %c0_12] : memref<256x128xf32, #tpu.memory_space<vmem>>, vector<128x128xf32>
      tpu.vector_store %arg6[%29, %c0_12], %28 {strides = array<i32>} : memref<256x128xf32, #tpu.memory_space<vmem>>, vector<128x128xf32>,
    } else {
    }
    %c2_i32 = arith.constant 2 : i32
    %8 = arith.cmpi eq, %arg0, %c2_i32 : i32
    %9 = arith.extui %8 : i1 to i32
    %c0_i32_2 = arith.constant 0 : i32
    %10 = arith.cmpi ne, %9, %c0_i32_2 : i32
    scf.if %10 {
      %c0 = arith.constant 0 : index
      %c0_3 = arith.constant 0 : index
      %11 = vector.load %arg8[%c0, %c0_3] : memref<256x128xbf16, #tpu.memory_space<vmem>>, vector<256x128xbf16>
      %c0_4 = arith.constant 0 : index
      %c0_5 = arith.constant 0 : index
      %12 = vector.load %arg3[%c0_4, %c0_5] : memref<256x256xbf16, #tpu.memory_space<vmem>>, vector<256x256xbf16>
      %cst = arith.constant dense<0.000000e+00> : vector<256x128xf32>
      %13 = tpu.matmul %12, %11, %cst {dimension_numbers = #tpu.dot_dimension_numbers<[1], [0], [0], [1], [0, 0, 1, 1], [], []>} : vector<256x256xbf16>, vector<256x128xbf16>, vector<256x128xf32> -> vector<256x128xf32>
      %14 = vector.extract_strided_slice %13 {offsets = [0, 0], sizes = [128, 128], strides = [1, 1]} : vector<256x128xf32> to vector<128x128xf32>
      %cst_6 = arith.constant 0.000000e+00 : f32
      %15 = vector.broadcast %cst_6 : f32 to vector<128x128xf32>
      %16 = arith.maximumf %14, %15 : vector<128x128xf32>
      %17 = vector.extract_strided_slice %13 {offsets = [128, 0], sizes = [128, 128], strides = [1, 1]} : vector<256x128xf32> to vector<128x128xf32>
      %cst_7 = arith.constant 0.000000e+00 : f32
      %18 = vector.broadcast %cst_7 : f32 to vector<128x128xf32>
      %19 = arith.maximumf %17, %18 : vector<128x128xf32>
      %20 = tpu.concatenate %16, %19 in 1 : vector<128x128xf32>, vector<128x128xf32> -> vector<128x256xf32>
      %21 = arith.truncf %20 : vector<128x256xf32> to vector<128x256xbf16>
      %c192 = arith.constant 192 : index
      %c0_8 = arith.constant 0 : index
      %22 = vector.load %arg5[%c192, %c0_8] : memref<448x128xbf16, #tpu.memory_space<vmem>>, vector<256x128xbf16>
      %cst_9 = arith.constant dense<0.000000e+00> : vector<128x128xf32>
      %23 = tpu.matmul %21, %22, %cst_9 {dimension_numbers = #tpu.dot_dimension_numbers<[1], [0], [0], [1], [0, 0, 1, 1], [], []>} : vector<128x256xbf16>, vector<256x128xbf16>, vector<128x128xf32> -> vector<128x128xf32>
      %24 = arith.index_cast %1 : i32 to index
      %c0_10 = arith.constant 0 : index
      %25 = vector.load %arg6[%24, %c0_10] : memref<256x128xf32, #tpu.memory_space<vmem>>, vector<128x128xf32>
      %26 = arith.addf %25, %23 : vector<128x128xf32>
      %27 = tpu.iota {dimensions = array<i32: 1>} : vector<128x128xi32>
      %c4_i32 = arith.constant 4 : i32
      %28 = vector.broadcast %c4_i32 : i32 to vector<128x128xi32>
      %29 = arith.cmpi slt, %27, %28 : vector<128x128xi32>
      %cst_11 = arith.constant -1.000000e+30 : f32
      %30 = vector.broadcast %cst_11 : f32 to vector<128x128xf32>
      %31 = arith.select %29, %26, %30 : vector<128x128xi1>, vector<128x128xf32>
      %cst_12 = arith.constant dense<0xFF800000> : vector<128xf32>
      %32 = vector.multi_reduction <maximumf>, %31, %cst_12 [1] : vector<128x128xf32> to vector<128xf32>
      %33 = vector.shape_cast %32 : vector<128xf32> to vector<128x1xf32>
      %34 = vector.broadcast %33 : vector<128x1xf32> to vector<128x128xf32>
      %35 = arith.subf %31, %34 : vector<128x128xf32>
      %36 = math.exp %35 : vector<128x128xf32>
      %cst_13 = arith.constant dense<0.000000e+00> : vector<128xf32>
      %37 = vector.multi_reduction <add>, %36, %cst_13 [1] : vector<128x128xf32> to vector<128xf32>
      %38 = vector.shape_cast %37 : vector<128xf32> to vector<128x1xf32>
      %39 = tpu.reciprocal %38 {approx = true} : vector<128x1xf32> -> vector<128x1xf32>
      %40 = vector.broadcast %39 : vector<128x1xf32> to vector<128x128xf32>
      %41 = arith.mulf %36, %40 : vector<128x128xf32>
      %42 = arith.index_cast %1 : i32 to index
      %c0_14 = arith.constant 0 : index
      %43 = vector.load %arg6[%42, %c0_14] : memref<256x128xf32, #tpu.memory_space<vmem>>, vector<128x128xf32>
      tpu.vector_store %arg6[%42, %c0_14], %41 {strides = array<i32>} : memref<256x128xf32, #tpu.memory_space<vmem>>, vector<128x128xf32>,
    } else {
    }
    return
  }
  func.func @transform_0(%arg0: i32, %arg1: i32) -> (i32, i32) {
    %c0_i32 = arith.constant 0 : i32
    %0 = arith.cmpi eq, %arg0, %c0_i32 : i32
    %c1_i32 = arith.constant 1 : i32
    %1 = arith.select %0, %arg1, %c1_i32 : i32
    %c0_i32_0 = arith.constant 0 : i32
    %c0_i32_1 = arith.constant 0 : i32
    return %1, %c0_i32_0 : i32, i32
  }
  func.func @transform_1(%arg0: i32, %arg1: i32) -> (i32, i32) {
    %c0_i32 = arith.constant 0 : i32
    %0 = arith.cmpi eq, %arg0, %c0_i32 : i32
    %c0_i32_0 = arith.constant 0 : i32
    %1 = arith.select %0, %c0_i32_0, %arg1 : i32
    %c0_i32_1 = arith.constant 0 : i32
    %c0_i32_2 = arith.constant 0 : i32
    return %1, %c0_i32_1 : i32, i32
  }
  func.func @transform_2(%arg0: i32, %arg1: i32) -> (i32, i32) {
    %c0_i32 = arith.constant 0 : i32
    %c0_i32_0 = arith.constant 0 : i32
    %c0_i32_1 = arith.constant 0 : i32
    return %c0_i32, %c0_i32_0 : i32, i32
  }
  func.func @transform_3(%arg0: i32, %arg1: i32) -> (i32, i32) {
    %c0_i32 = arith.constant 0 : i32
    %c0_i32_0 = arith.constant 0 : i32
    %c0_i32_1 = arith.constant 0 : i32
    return %c0_i32, %c0_i32_0 : i32, i32
  }
  func.func @transform_4(%arg0: i32, %arg1: i32) -> (i32, i32) {
    %c0_i32 = arith.constant 0 : i32
    %c0_i32_0 = arith.constant 0 : i32
    %c0_i32_1 = arith.constant 0 : i32
    return %c0_i32, %c0_i32_0 : i32, i32
  }
}

</mosaic_0001>

<llo_original>
// kernel: tpu_custom_call.1
$region0: #{tpu_custom_call.1}
  #allocation0 [shape = 'u32[]', space=smem, size = 0x4, offset = 0x4, fixed_abs, tag = 'smem constant byte address 0x4 - core index']
  #allocation1 [shape = 'u32[144,128]{1,0:T(1,128)}', space=vmem, size = 0x12000, scoped, tag = 'internal scratch']
  #allocation2 [shape = 'bf16[256,64]{1,0:T(16,128)(2,1)}', space=vmem, size = 0x10000, scoped, tag = 'scratch operand']
  #allocation3 [shape = 'bf16[256,128]{1,0:T(16,128)(2,1)}', space=vmem, size = 0x10000, scoped, tag = 'scratch operand']
  %s0 = inlined_call_operand.hbm [shape: bf16[256,128], index: 0, kind: input, shape index: {}]
  %s1 = inlined_call_operand.hbm [shape: bf16[512,256], index: 1, kind: input, shape index: {}]
  %s2 = inlined_call_operand.vmem [shape: bf16[128,64], index: 2, kind: input, shape index: {}]
  %s3 = inlined_call_operand.hbm [shape: bf16[448,128], index: 3, kind: input, shape index: {}]
  %s4 = inlined_call_operand.hbm [shape: f32[256,128], index: 4, kind: output, shape index: {}]
  %s5 = sld [smem:[#allocation0]]
  $region73: #{tpu_custom_call.1} parent=0
    _
  %s7 = ssub.s32 1, %s5
  %s8 = scalar_select 0, %s7, %s5
  $region1: #{tpu_custom_call.1} parent=0
    #allocation4 [shape = 'u8[65536]{0}', space=vmem, size = 0x10000, scoped, tag = 'input window, operand 0']
    #allocation5 [shape = 's32[2]{0}', space=sflag, size = 0x8, scoped, tag = 'scoped memory for tpu_custom_call.1']
    #allocation6 [shape = 's32[2]{0}', space=sflag, size = 0x8, scoped, tag = 'scoped memory for tpu_custom_call.1']
    #allocation7 [shape = 'u8[262144]{0}', space=vmem, size = 0x40000, scoped, tag = 'input window, operand 1']
    #allocation8 [shape = 's32[2]{0}', space=sflag, size = 0x8, scoped, tag = 'scoped memory for tpu_custom_call.1']
    #allocation9 [shape = 'u8[114688]{0}', space=vmem, size = 0x1c000, scoped, tag = 'input window, operand 3, single buffered']
    #allocation10 [shape = 'u8[131072]{0}', space=vmem, size = 0x20000, scoped, tag = 'output window, operand 0, single buffered']
    %9 = vsyncpa [#allocation5], 0
    %s10 = scalar_lea.sflag [#allocation5], 1
    %11 = vsyncpa %s10, 0
    %12 = vsyncpa [#allocation8], 0
    %s13 = scalar_lea.sflag [#allocation8], 1
    %14 = vsyncpa %s13, 0
    %15 = vsyncpa [#allocation6], 0
    loop: start=0, step=1, limit=8
    $region2: #{tpu_custom_call.1} parent=1 // loop_pre_header
      _
    $region3: #{tpu_custom_call.1} parent=1 // loop_header
      %s17 = sphi 0, %s21
      %p18 = scmp.ge.s32.totalorder %s17, 8
      %s24 = sphi 0, %s36
      %s25 = sphi 0, %s32
      %s26 = sphi 0, %s24
      %s27 = sphi 0, %s25
      %s28 = sphi 0, %s26
      %s29 = sphi 0, %s27
      %s43 = sphi 0, %s45
      %s46 = sphi 0, %s43
      %s47 = sphi 0, %s46
      %s63 = sphi 0, %s47
      %s73 = sphi 0, %s75
      %s76 = sphi 0, %s73
      %s77 = sphi 0, %s76
      %s93 = sphi 0, %s77
      %s97 = sphi 0, %s97
      %s99 = sphi 0, %s97
      %s100 = sphi 0, %s99
      %s114 = sphi 0, %s100
      %s118 = sphi 0, %s118
      %s120 = sphi 0, %s118
      %s121 = sphi 0, %s120
      %s135 = sphi 0, %s121
      %s139 = sphi 0, %s139
      %s141 = sphi 0, %s139
      %s142 = sphi 0, %s141
      %s156 = sphi 0, %s142
    $region4: #{tpu_custom_call.1} parent=1 // loop_header_branch
      %20 = sbr.rel (%p18) target = $region8
    $region5: #{tpu_custom_call.1} parent=1 // loop_body
      %s22 = ssub.s32 %s17, 1
      %s23 = ssub.s32 %s17, 2
      %s30 = sadd.s32 1, %s25
      %p31 = scmp.ge.s32.totalorder %s30, 2
      %s32 = scalar_select %p31, 0, %s30
      %s33 = sadd.s32 1, %s24
      %s34 = scalar_select %p31, %s33, %s24
      %p35 = scmp.ge.s32.totalorder %s34, 3
      %s36 = scalar_select %p35, 0, %s34
      %p37 = scmp.eq.s32.totalorder %s24, 0
      %s38 = scalar_select %p37, %s25, 1
      %p39 = scmp.eq.s32.totalorder %s36, 0
      %s40 = scalar_select %p39, %s32, 1
      %s41 = ssub.s32 %s38, %s40
      %p42 = scmp.eq.s32.totalorder %s41, 0
      %s44 = sadd.s32 %s43, 1
      %s45 = scalar_select %p42, %s43, %s44
      %p48 = pneg %p42
      %p49 = scmp.eq.s32.totalorder %s17, 5
      %p50 = por %p48, %p49
      %p51 = scmp.ne.s32.totalorder %s43, %s46
      %p52 = scmp.eq.s32.totalorder %s17, 0
      %p53 = por %p51, %p52
      %p54 = scmp.ne.s32.totalorder %s43, %s46
      %p55 = scmp.eq.s32.totalorder %s22, 5
      %p56 = por %p54, %p55
      %p57 = scmp.ne.s32.totalorder %s46, %s47
      %p58 = scmp.eq.s32.totalorder %s22, 0
      %p59 = por %p57, %p58
      %p60 = scmp.ne.s32.totalorder %s46, %s47
      %p61 = scmp.eq.s32.totalorder %s23, 5
      %p62 = por %p60, %p61
      %p64 = scmp.ne.s32.totalorder %s47, %s63
      %p65 = scmp.eq.s32.totalorder %s23, 0
      %p66 = por %p64, %p65
      %p67 = scmp.eq.s32.totalorder %s24, 0
      %s68 = scalar_select %p67, 0, %s25
      %p69 = scmp.eq.s32.totalorder %s36, 0
      %s70 = scalar_select %p69, 0, %s32
      %s71 = ssub.s32 %s68, %s70
      %p72 = scmp.eq.s32.totalorder %s71, 0
      %s74 = sadd.s32 %s73, 1
      %s75 = scalar_select %p72, %s73, %s74
      %p78 = pneg %p72
      %p79 = scmp.eq.s32.totalorder %s17, 5
      %p80 = por %p78, %p79
      %p81 = scmp.ne.s32.totalorder %s73, %s76
      %p82 = scmp.eq.s32.totalorder %s17, 0
      %p83 = por %p81, %p82
      %p84 = scmp.ne.s32.totalorder %s73, %s76
      %p85 = scmp.eq.s32.totalorder %s22, 5
      %p86 = por %p84, %p85
      %p87 = scmp.ne.s32.totalorder %s76, %s77
      %p88 = scmp.eq.s32.totalorder %s22, 0
      %p89 = por %p87, %p88
      %p90 = scmp.ne.s32.totalorder %s76, %s77
      %p91 = scmp.eq.s32.totalorder %s23, 5
      %p92 = por %p90, %p91
      %p94 = scmp.ne.s32.totalorder %s77, %s93
      %p95 = scmp.eq.s32.totalorder %s23, 0
      %p96 = por %p94, %p95
      %s98 = sadd.s32 %s97, 1
      %p101 = scmp.eq.s32.totalorder %s17, 5
      %p102 = scmp.ne.s32.totalorder %s97, %s99
      %p103 = scmp.eq.s32.totalorder %s17, 0
      %p104 = por %p102, %p103
      %p105 = scmp.ne.s32.totalorder %s97, %s99
      %p106 = scmp.eq.s32.totalorder %s22, 5
      %p107 = por %p105, %p106
      %p108 = scmp.ne.s32.totalorder %s99, %s100
      %p109 = scmp.eq.s32.totalorder %s22, 0
      %p110 = por %p108, %p109
      %p111 = scmp.ne.s32.totalorder %s99, %s100
      %p112 = scmp.eq.s32.totalorder %s23, 5
      %p113 = por %p111, %p112
      %p115 = scmp.ne.s32.totalorder %s100, %s114
      %p116 = scmp.eq.s32.totalorder %s23, 0
      %p117 = por %p115, %p116
      %s119 = sadd.s32 %s118, 1
      %p122 = scmp.eq.s32.totalorder %s17, 5
      %p123 = scmp.ne.s32.totalorder %s118, %s120
      %p124 = scmp.eq.s32.totalorder %s17, 0
      %p125 = por %p123, %p124
      %p126 = scmp.ne.s32.totalorder %s118, %s120
      %p127 = scmp.eq.s32.totalorder %s22, 5
      %p128 = por %p126, %p127
      %p129 = scmp.ne.s32.totalorder %s120, %s121
      %p130 = scmp.eq.s32.totalorder %s22, 0
      %p131 = por %p129, %p130
      %p132 = scmp.ne.s32.totalorder %s120, %s121
      %p133 = scmp.eq.s32.totalorder %s23, 5
      %p134 = por %p132, %p133
      %p136 = scmp.ne.s32.totalorder %s121, %s135
      %p137 = scmp.eq.s32.totalorder %s23, 0
      %p138 = por %p136, %p137
      %s140 = sadd.s32 %s139, 1
      %p143 = scmp.eq.s32.totalorder %s17, 5
      %p144 = scmp.ne.s32.totalorder %s139, %s141
      %p145 = scmp.eq.s32.totalorder %s17, 0
      %p146 = por %p144, %p145
      %p147 = scmp.ne.s32.totalorder %s139, %s141
      %p148 = scmp.eq.s32.totalorder %s22, 5
      %p149 = por %p147, %p148
      %p150 = scmp.ne.s32.totalorder %s141, %s142
      %p151 = scmp.eq.s32.totalorder %s22, 0
      %p152 = por %p150, %p151
      %p153 = scmp.ne.s32.totalorder %s141, %s142
      %p154 = scmp.eq.s32.totalorder %s23, 5
      %p155 = por %p153, %p154
      %p157 = scmp.ne.s32.totalorder %s142, %s156
      %p158 = scmp.eq.s32.totalorder %s23, 0
      %p159 = por %p157, %p158
      %p160 = scmp.le.s32.totalorder 1, %s17
      %p161 = scmp.lt.s32.totalorder %s17, 7
      %p162 = pnand %p160, %p161
      %p163 = pneg %p162
      // Predicated region
      $region9: #{tpu_custom_call.1} parent=5 // pred_check
        _
      $region10: #{tpu_custom_call.1} parent=5 // pred_check_branch
        %165 = sbr.rel (%p162) target = $region12
      $region11: #{tpu_custom_call.1} parent=5 // pred_region
        %s166 = ssub.s32 %s17, 1
        // Predicated region
        $region13: #{tpu_custom_call.1} parent=11 // pred_check
          %p167 = pneg %p110
        $region14: #{tpu_custom_call.1} parent=11 // pred_check_branch
          %169 = sbr.rel (%p167) target = $region16
        $region15: #{tpu_custom_call.1} parent=11 // pred_region
          _
        $region16: #{tpu_custom_call.1} parent=11 // pred_fallthru
          _
        // Predicated region
        $region17: #{tpu_custom_call.1} parent=11 // pred_check
          %p170 = pneg %p131
        $region18: #{tpu_custom_call.1} parent=11 // pred_check_branch
          %172 = sbr.rel (%p170) target = $region20
        $region19: #{tpu_custom_call.1} parent=11 // pred_region
          %s174 = ssub.s32 3584, 3584
          %175 = vsyncadd [#allocation8], %s174
          %s176 = sshll.u32 [#allocation9], 4
          %s177 = int_to_ptr.vmem [resolvable:$true] %s176
          %182 = dma.hbm_to_vmem [thread:$0]  %s3, 3584, %s177, [#allocation8], 64, 64, 4
        $region20: #{tpu_custom_call.1} parent=11 // pred_fallthru
          _
      $region12: #{tpu_custom_call.1} parent=5 // pred_fallthru
        _
      %p183 = scmp.lt.s32.totalorder %s17, 6
      // Predicated region
      $region21: #{tpu_custom_call.1} parent=5 // pred_check
        %p184 = pneg %p183
      $region22: #{tpu_custom_call.1} parent=5 // pred_check_branch
        %186 = sbr.rel (%p184) target = $region24
      $region23: #{tpu_custom_call.1} parent=5 // pred_region
        // Predicated region
        $region25: #{tpu_custom_call.1} parent=23 // pred_check
          %p187 = pneg %p53
        $region26: #{tpu_custom_call.1} parent=23 // pred_check_branch
          %189 = sbr.rel (%p187) target = $region28
        $region27: #{tpu_custom_call.1} parent=23 // pred_region
          %s190 = sand.u32 %s43, 1
          %s191 = scalar_lea.sflag [#allocation5], %s190
          %s192 = sand.u32 %s43, 1
          %s193 = smul.addr %s192, 64
          %s194 = scalar_lea.vmem [#allocation4], %s193
          %p195 = scmp.eq.s32.totalorder %s24, 0
          %s196 = scalar_select %p195, %s25, 1
          %s197 = smul.u32 16, %s196
          %s199 = ssub.s32 1024, 1024
          %200 = vsyncadd %s191, %s199
          %s201 = smul.addr %s197, 64
          %s202 = scalar_lea.hbm %s0, %s201
          %s203 = sshll.u32 %s194, 4
          %s204 = int_to_ptr.vmem [resolvable:$true] %s203
          %209 = dma.hbm_to_vmem [thread:$0]  %s202, 1024, %s204, %s191, 64, 64, 4
        $region28: #{tpu_custom_call.1} parent=23 // pred_fallthru
          _
        // Predicated region
        $region29: #{tpu_custom_call.1} parent=23 // pred_check
          %p210 = pneg %p83
        $region30: #{tpu_custom_call.1} parent=23 // pred_check_branch
          %212 = sbr.rel (%p210) target = $region32
        $region31: #{tpu_custom_call.1} parent=23 // pred_region
          %s213 = sand.u32 %s17, 1
          %s214 = scalar_lea.sflag [#allocation8], %s213
          %s215 = sand.u32 %s73, 1
          %s216 = smul.addr %s215, 256
          %s217 = scalar_lea.vmem [#allocation7], %s216
          %p218 = scmp.eq.s32.totalorder %s24, 0
          %s219 = scalar_select %p218, 0, %s25
          %s220 = smul.u32 32, %s219
          %s222 = ssub.s32 4096, 4096
          %223 = vsyncadd %s214, %s222
          %s224 = smul.addr %s220, 2
          %s225 = smul.addr %s224, 64
          %s226 = scalar_lea.hbm %s1, %s225
          %s227 = sshll.u32 %s217, 4
          %s228 = int_to_ptr.vmem [resolvable:$true] %s227
          %233 = dma.hbm_to_vmem [thread:$0]  %s226, 4096, %s228, %s214, 128, 128, 8
        $region32: #{tpu_custom_call.1} parent=23 // pred_fallthru
          _
      $region24: #{tpu_custom_call.1} parent=5 // pred_fallthru
        _
      %p234 = scmp.le.s32.totalorder 1, %s17
      %p235 = scmp.lt.s32.totalorder %s17, 7
      %p236 = pnand %p234, %p235
      %p237 = pneg %p236
      // Predicated region
      $region33: #{tpu_custom_call.1} parent=5 // pred_check
        _
      $region34: #{tpu_custom_call.1} parent=5 // pred_check_branch
        %239 = sbr.rel (%p236) target = $region36
      $region35: #{tpu_custom_call.1} parent=5 // pred_region
        %s240 = ssub.s32 %s17, 1
        %s241 = sand.u32 %s46, 1
        %s242 = scalar_lea.sflag [#allocation5], %s241
        %s243 = sand.u32 %s46, 1
        %s244 = smul.addr %s243, 64
        %s245 = scalar_lea.vmem [#allocation4], %s244
        // Predicated region
        $region37: #{tpu_custom_call.1} parent=35 // pred_check
          %p246 = pneg %p59
        $region38: #{tpu_custom_call.1} parent=35 // pred_check_branch
          %248 = sbr.rel (%p246) target = $region40
        $region39: #{tpu_custom_call.1} parent=35 // pred_region
          %249 = dma.done %s242, 1024
        $region40: #{tpu_custom_call.1} parent=35 // pred_fallthru
          _
        %s250 = sand.u32 %s22, 1
        %s251 = scalar_lea.sflag [#allocation8], %s250
        %s252 = sand.u32 %s76, 1
        %s253 = smul.addr %s252, 256
        %s254 = scalar_lea.vmem [#allocation7], %s253
        // Predicated region
        $region41: #{tpu_custom_call.1} parent=35 // pred_check
          %p255 = pneg %p89
        $region42: #{tpu_custom_call.1} parent=35 // pred_check_branch
          %257 = sbr.rel (%p255) target = $region44
        $region43: #{tpu_custom_call.1} parent=35 // pred_region
          %258 = dma.done %s251, 4096
        $region44: #{tpu_custom_call.1} parent=35 // pred_fallthru
          _
        // Predicated region
        $region45: #{tpu_custom_call.1} parent=35 // pred_check
          %p259 = pneg %p131
        $region46: #{tpu_custom_call.1} parent=35 // pred_check_branch
          %261 = sbr.rel (%p259) target = $region48
        $region47: #{tpu_custom_call.1} parent=35 // pred_region
          %262 = dma.done [#allocation8], 3584
        $region48: #{tpu_custom_call.1} parent=35 // pred_fallthru
          _
        %s263 = sand.u32 %s46, 1
        %s264 = scalar_lea.sflag [#allocation5], %s263
        %s265 = sand.u32 %s46, 1
        %s266 = smul.addr %s265, 64
        %s267 = scalar_lea.vmem [#allocation4], %s266
        %p268 = pneg %p59
        %p269 = pneg %p56
        %s270 = sand.u32 %s22, 1
        %s271 = scalar_lea.sflag [#allocation8], %s270
        %s272 = sand.u32 %s76, 1
        %s273 = smul.addr %s272, 256
        %s274 = scalar_lea.vmem [#allocation7], %s273
        %p275 = pneg %p89
        %p276 = pneg %p86
        %p277 = pneg %p110
        %p278 = pneg %p107
        %p279 = pneg %p131
        %p280 = pneg %p128
        %p281 = pneg %p152
        %p282 = pneg %p149
        %p283 = scmp.eq.s32.totalorder %s26, 0
        %s284 = scalar_select %p283, %s27, 1
        %s285 = smul.u32 16, %s284
        %p286 = scmp.eq.s32.totalorder %s26, 0
        %s287 = scalar_select %p286, 0, %s27
        %s288 = smul.u32 32, %s287
        %s290 = smul.u32 %s27, 128
        %p291 = scmp.eq.s32.totalorder %s26, 0
        // Predicated region
        $region49: #{tpu_custom_call.1} parent=35 // pred_check
          %p292 = pneg %p291
        $region50: #{tpu_custom_call.1} parent=35 // pred_check_branch
          %294 = sbr.rel (%p292) target = $region52
        $region51: #{tpu_custom_call.1} parent=35 // pred_region
          %v295 = vld [vmem:[%s245] sm:$0xf]
          %v296 = vld [vmem:[%s245 + $0x4] sm:$0xf]
          %v297 = vld [vmem:[%s245 + $0x8] sm:$0xf]
          %v298 = vld [vmem:[%s245 + $0xc] sm:$0xf]
          %v299 = vld [vmem:[%s245 + $0x10] sm:$0xf]
          %v300 = vld [vmem:[%s245 + $0x14] sm:$0xf]
          %v301 = vld [vmem:[%s245 + $0x18] sm:$0xf]
          %v302 = vld [vmem:[%s245 + $0x1c] sm:$0xf]
          %v303 = vld [vmem:[%s245 + $0x20] sm:$0xf]
          %v304 = vld [vmem:[%s245 + $0x24] sm:$0xf]
          %v305 = vld [vmem:[%s245 + $0x28] sm:$0xf]
          %v306 = vld [vmem:[%s245 + $0x2c] sm:$0xf]
          %v307 = vld [vmem:[%s245 + $0x30] sm:$0xf]
          %v308 = vld [vmem:[%s245 + $0x34] sm:$0xf]
          %v309 = vld [vmem:[%s245 + $0x38] sm:$0xf]
          %v310 = vld [vmem:[%s245 + $0x3c] sm:$0xf]
          %v311 = vld [vmem:[%s2] sm:$0xf]
          %v312 = vld [vmem:[%s2 + $0x4] sm:$0xf]
          %v313 = vld [vmem:[%s2 + $0x8] sm:$0xf]
          %v314 = vld [vmem:[%s2 + $0xc] sm:$0xf]
          %v315 = vld [vmem:[%s2 + $0x10] sm:$0xf]
          %v316 = vld [vmem:[%s2 + $0x14] sm:$0xf]
          %v317 = vld [vmem:[%s2 + $0x18] sm:$0xf]
          %v318 = vld [vmem:[%s2 + $0x1c] sm:$0xf]
          %v319 = vld [vmem:[%s2 + $0x20] sm:$0xf]
          %v320 = vld [vmem:[%s2 + $0x24] sm:$0xf]
          %v321 = vld [vmem:[%s2 + $0x28] sm:$0xf]
          %v322 = vld [vmem:[%s2 + $0x2c] sm:$0xf]
          %v323 = vld [vmem:[%s2 + $0x30] sm:$0xf]
          %v324 = vld [vmem:[%s2 + $0x34] sm:$0xf]
          %v325 = vld [vmem:[%s2 + $0x38] sm:$0xf]
          %v326 = vld [vmem:[%s2 + $0x3c] sm:$0xf]
          %v343 = vunpack.c.l.b16 %v295
          %v344 = vunpack.c.l.b16 %v296
          %v345 = vunpack.c.l.b16 %v297
          %v346 = vunpack.c.l.b16 %v298
          %v347 = vunpack.c.l.b16 %v299
          %v348 = vunpack.c.l.b16 %v300
          %v349 = vunpack.c.l.b16 %v301
          %v350 = vunpack.c.l.b16 %v302
          %v351 = vunpack.c.l.b16 %v303
          %v352 = vunpack.c.l.b16 %v304
          %v353 = vunpack.c.l.b16 %v305
          %v354 = vunpack.c.l.b16 %v306
          %v355 = vunpack.c.l.b16 %v307
          %v356 = vunpack.c.l.b16 %v308
          %v357 = vunpack.c.l.b16 %v309
          %v358 = vunpack.c.l.b16 %v310
          %v359 = vpack.c.b16 %v344, %v343
          %v360 = vpack.c.b16 %v346, %v345
          %v361 = vpack.c.b16 %v348, %v347
          %v362 = vpack.c.b16 %v350, %v349
          %v363 = vpack.c.b16 %v352, %v351
          %v364 = vpack.c.b16 %v354, %v353
          %v365 = vpack.c.b16 %v356, %v355
          %v366 = vpack.c.b16 %v358, %v357
          %v391 = vunpack.c.l.b16 %v311
          %v392 = vunpack.c.l.b16 %v312
          %v393 = vunpack.c.l.b16 %v313
          %v394 = vunpack.c.l.b16 %v314
          %v395 = vunpack.c.l.b16 %v315
          %v396 = vunpack.c.l.b16 %v316
          %v397 = vunpack.c.l.b16 %v317
          %v398 = vunpack.c.l.b16 %v318
          %v399 = vunpack.c.l.b16 %v319
          %v400 = vunpack.c.l.b16 %v320
          %v401 = vunpack.c.l.b16 %v321
          %v402 = vunpack.c.l.b16 %v322
          %v403 = vunpack.c.l.b16 %v323
          %v404 = vunpack.c.l.b16 %v324
          %v405 = vunpack.c.l.b16 %v325
          %v406 = vunpack.c.l.b16 %v326
          %v407 = vpack.c.b16 %v392, %v391
          %v408 = vpack.c.b16 %v394, %v393
          %v409 = vpack.c.b16 %v396, %v395
          %v410 = vpack.c.b16 %v398, %v397
          %v411 = vpack.c.b16 %v400, %v399
          %v412 = vpack.c.b16 %v402, %v401
          %v413 = vpack.c.b16 %v404, %v403
          %v414 = vpack.c.b16 %v406, %v405
          %423 = vmatprep.subr.bf16.mxu0 0
          %424 = vmatpush1.bf16.msra.mxu0 %v407
          %425 = vmatprep.subr.bf16.mxu0 0
          %426 = vmatpush1.bf16.msra.mxu0 %v408
          %427 = vmatprep.subr.bf16.mxu0 0
          %428 = vmatpush1.bf16.msra.mxu0 %v409
          %429 = vmatprep.subr.bf16.mxu0 0
          %430 = vmatpush1.bf16.msra.mxu0 %v410
          %431 = vmatprep.subr.bf16.mxu0 0
          %432 = vmatpush1.bf16.msra.mxu0 %v411
          %433 = vmatprep.subr.bf16.mxu0 0
          %434 = vmatpush1.bf16.msra.mxu0 %v412
          %435 = vmatprep.subr.bf16.mxu0 0
          %436 = vmatpush1.bf16.msra.mxu0 %v413
          %437 = vmatprep.subr.bf16.mxu0 0
          %438 = vmatpush1.bf16.msra.mxu0 %v414
          %439 = vmatprep.subr.bf16.mxu0 0
          %440 = vmatpush1.bf16.msra.mxu0 0
          %441 = vmatprep.subr.bf16.mxu0 0
          %442 = vmatpush1.bf16.msra.mxu0 0
          %443 = vmatprep.subr.bf16.mxu0 0
          %444 = vmatpush1.bf16.msra.mxu0 0
          %445 = vmatprep.subr.bf16.mxu0 0
          %446 = vmatpush1.bf16.msra.mxu0 0
          %447 = vmatprep.subr.bf16.mxu0 0
          %448 = vmatpush1.bf16.msra.mxu0 0
          %449 = vmatprep.subr.bf16.mxu0 0
          %450 = vmatpush1.bf16.msra.mxu0 0
          %451 = vmatprep.subr.bf16.mxu0 0
          %452 = vmatpush1.bf16.msra.mxu0 0
          %453 = vmatprep.subr.bf16.mxu0 0
          %454 = vmatpush1.bf16.msra.mxu0 0
          %455 = vmatprep.mubr.bf16.mxu0 0
          %456 = vmatmul.mubr.bf16.gmra.mrb[0].mxu0 %v359
          %v457 = vpop.f32.mrb[0].mxu0
          %v458 = vadd.f32 0.0, %v457
          %v459 = vpop.f32.mrb[0].mxu0
          %v460 = vpop.f32.mrb[0].mxu0
          %v461 = vadd.f32 0.0, %v460
          %v462 = vpop.f32.mrb[0].mxu0
          %463 = vmatprep.mubr.bf16.mxu0 0
          %464 = vmatmul.mubr.bf16.gmra.mrb[0].mxu0 %v360
          %v465 = vpop.f32.mrb[0].mxu0
          %v466 = vadd.f32 0.0, %v465
          %v467 = vpop.f32.mrb[0].mxu0
          %v468 = vpop.f32.mrb[0].mxu0
          %v469 = vadd.f32 0.0, %v468
          %v470 = vpop.f32.mrb[0].mxu0
          %471 = vmatprep.mubr.bf16.mxu0 0
          %472 = vmatmul.mubr.bf16.gmra.mrb[0].mxu0 %v361
          %v473 = vpop.f32.mrb[0].mxu0
          %v474 = vadd.f32 0.0, %v473
          %v475 = vpop.f32.mrb[0].mxu0
          %v476 = vpop.f32.mrb[0].mxu0
          %v477 = vadd.f32 0.0, %v476
          %v478 = vpop.f32.mrb[0].mxu0
          %479 = vmatprep.mubr.bf16.mxu0 0
          %480 = vmatmul.mubr.bf16.gmra.mrb[0].mxu0 %v362
          %v481 = vpop.f32.mrb[0].mxu0
          %v482 = vadd.f32 0.0, %v481
          %v483 = vpop.f32.mrb[0].mxu0
          %v484 = vpop.f32.mrb[0].mxu0
          %v485 = vadd.f32 0.0, %v484
          %v486 = vpop.f32.mrb[0].mxu0
          %487 = vmatprep.mubr.bf16.mxu0 0
          %488 = vmatmul.mubr.bf16.gmra.mrb[0].mxu0 %v363
          %v489 = vpop.f32.mrb[0].mxu0
          %v490 = vadd.f32 0.0, %v489
          %v491 = vpop.f32.mrb[0].mxu0
          %v492 = vpop.f32.mrb[0].mxu0
          %v493 = vadd.f32 0.0, %v492
          %v494 = vpop.f32.mrb[0].mxu0
          %495 = vmatprep.mubr.bf16.mxu0 0
          %496 = vmatmul.mubr.bf16.gmra.mrb[0].mxu0 %v364
          %v497 = vpop.f32.mrb[0].mxu0
          %v498 = vadd.f32 0.0, %v497
          %v499 = vpop.f32.mrb[0].mxu0
          %v500 = vpop.f32.mrb[0].mxu0
          %v501 = vadd.f32 0.0, %v500
          %v502 = vpop.f32.mrb[0].mxu0
          %503 = vmatprep.mubr.bf16.mxu0 0
          %504 = vmatmul.mubr.bf16.gmra.mrb[0].mxu0 %v365
          %v505 = vpop.f32.mrb[0].mxu0
          %v506 = vadd.f32 0.0, %v505
          %v507 = vpop.f32.mrb[0].mxu0
          %v508 = vpop.f32.mrb[0].mxu0
          %v509 = vadd.f32 0.0, %v508
          %v510 = vpop.f32.mrb[0].mxu0
          %511 = vmatprep.mubr.bf16.mxu0 0
          %512 = vmatmul.mubr.bf16.gmra.mrb[0].mxu0 %v366
          %v513 = vpop.f32.mrb[0].mxu0
          %v514 = vadd.f32 0.0, %v513
          %v515 = vpop.f32.mrb[0].mxu0
          %v516 = vpop.f32.mrb[0].mxu0
          %v517 = vadd.f32 0.0, %v516
          %v518 = vpop.f32.mrb[0].mxu0
          %519 = vdwg.mxu0
          %v520 = vmax.f32 %v458, 0.0
          %v521 = vmax.f32 %v461, 0.0
          %v522 = vmax.f32 %v466, 0.0
          %v523 = vmax.f32 %v469, 0.0
          %v524 = vmax.f32 %v474, 0.0
          %v525 = vmax.f32 %v477, 0.0
          %v526 = vmax.f32 %v482, 0.0
          %v527 = vmax.f32 %v485, 0.0
          %v528 = vmax.f32 %v490, 0.0
          %v529 = vmax.f32 %v493, 0.0
          %v530 = vmax.f32 %v498, 0.0
          %v531 = vmax.f32 %v501, 0.0
          %v532 = vmax.f32 %v506, 0.0
          %v533 = vmax.f32 %v509, 0.0
          %v534 = vmax.f32 %v514, 0.0
          %v535 = vmax.f32 %v517, 0.0
          %v536 = vpack.c.bf16 %v521, %v520
          %v537 = vpack.c.bf16 %v523, %v522
          %v538 = vpack.c.bf16 %v525, %v524
          %v539 = vpack.c.bf16 %v527, %v526
          %v540 = vpack.c.bf16 %v529, %v528
          %v541 = vpack.c.bf16 %v531, %v530
          %v542 = vpack.c.bf16 %v533, %v532
          %v543 = vpack.c.bf16 %v535, %v534
          %s544 = sshra.s32 %s290, 4
          %s545 = sand.u32 %s290, 15
          %s546 = smul.addr %s544, 8
          %s547 = scalar_lea.vmem [#allocation2], %s546
          %vm548 = vcmask 523264
          %549 = vst.msk [vmem:[%s547] sm:$0xff] %vm548, %v536
          %550 = vst.msk [vmem:[%s547 + $0x8] sm:$0xff] %vm548, %v537
          %551 = vst.msk [vmem:[%s547 + $0x10] sm:$0xff] %vm548, %v538
          %552 = vst.msk [vmem:[%s547 + $0x18] sm:$0xff] %vm548, %v539
          %553 = vst.msk [vmem:[%s547 + $0x20] sm:$0xff] %vm548, %v540
          %554 = vst.msk [vmem:[%s547 + $0x28] sm:$0xff] %vm548, %v541
          %555 = vst.msk [vmem:[%s547 + $0x30] sm:$0xff] %vm548, %v542
          %556 = vst.msk [vmem:[%s547 + $0x38] sm:$0xff] %vm548, %v543
          %v557 = vld [vmem:[#allocation9] sm:$0xf]
          %v558 = vld [vmem:[#allocation9 + $0x4] sm:$0xf]
          %v559 = vld [vmem:[#allocation9 + $0x8] sm:$0xf]
          %v560 = vld [vmem:[#allocation9 + $0xc] sm:$0xf]
          %v561 = vld [vmem:[#allocation9 + $0x10] sm:$0xf]
          %v562 = vld [vmem:[#allocation9 + $0x14] sm:$0xf]
          %v563 = vld [vmem:[#allocation9 + $0x18] sm:$0xf]
          %v564 = vld [vmem:[#allocation9 + $0x1c] sm:$0xf]
          %v573 = vunpack.c.l.b16 %v557
          %v574 = vunpack.c.l.b16 %v558
          %v575 = vunpack.c.l.b16 %v559
          %v576 = vunpack.c.l.b16 %v560
          %v577 = vunpack.c.l.b16 %v561
          %v578 = vunpack.c.l.b16 %v562
          %v579 = vunpack.c.l.b16 %v563
          %v580 = vunpack.c.l.b16 %v564
          %v581 = vpack.c.b16 %v574, %v573
          %v582 = vpack.c.b16 %v576, %v575
          %v583 = vpack.c.b16 %v578, %v577
          %v584 = vpack.c.b16 %v580, %v579
          %v590 = vsel %vm548, %v536, 0
          %v593 = vsel %vm548, %v537, 0
          %v596 = vsel %vm548, %v538, 0
          %v599 = vsel %vm548, %v539, 0
          %v602 = vsel %vm548, %v540, 0
          %v605 = vsel %vm548, %v541, 0
          %v608 = vsel %vm548, %v542, 0
          %v611 = vsel %vm548, %v543, 0
          %613 = vmatprep.subr.bf16.mxu0 0
          %614 = vmatpush1.bf16.msra.mxu0 %v581
          %615 = vmatprep.subr.bf16.mxu0 0
          %616 = vmatpush1.bf16.msra.mxu0 %v582
          %617 = vmatprep.subr.bf16.mxu0 0
          %618 = vmatpush1.bf16.msra.mxu0 %v583
          %619 = vmatprep.subr.bf16.mxu0 0
          %620 = vmatpush1.bf16.msra.mxu0 %v584
          %621 = vmatprep.subr.bf16.mxu0 0
          %622 = vmatpush1.bf16.msra.mxu0 0
          %623 = vmatprep.subr.bf16.mxu0 0
          %624 = vmatpush1.bf16.msra.mxu0 0
          %625 = vmatprep.subr.bf16.mxu0 0
          %626 = vmatpush1.bf16.msra.mxu0 0
          %627 = vmatprep.subr.bf16.mxu0 0
          %628 = vmatpush1.bf16.msra.mxu0 0
          %629 = vmatprep.subr.bf16.mxu0 0
          %630 = vmatpush1.bf16.msra.mxu0 0
          %631 = vmatprep.subr.bf16.mxu0 0
          %632 = vmatpush1.bf16.msra.mxu0 0
          %633 = vmatprep.subr.bf16.mxu0 0
          %634 = vmatpush1.bf16.msra.mxu0 0
          %635 = vmatprep.subr.bf16.mxu0 0
          %636 = vmatpush1.bf16.msra.mxu0 0
          %637 = vmatprep.subr.bf16.mxu0 0
          %638 = vmatpush1.bf16.msra.mxu0 0
          %639 = vmatprep.subr.bf16.mxu0 0
          %640 = vmatpush1.bf16.msra.mxu0 0
          %641 = vmatprep.subr.bf16.mxu0 0
          %642 = vmatpush1.bf16.msra.mxu0 0
          %643 = vmatprep.subr.bf16.mxu0 0
          %644 = vmatpush1.bf16.msra.mxu0 0
          %645 = vmatprep.mubr.bf16.mxu0 0
          %646 = vmatmul.mubr.bf16.gmra.mrb[0].mxu0 %v590
          %v647 = vpop.f32.mrb[0].mxu0
          %v648 = vadd.f32 0.0, %v647
          %v649 = vpop.f32.mrb[0].mxu0
          %v650 = vpop.f32.mrb[0].mxu0
          %v651 = vadd.f32 0.0, %v650
          %v652 = vpop.f32.mrb[0].mxu0
          %653 = vmatprep.mubr.bf16.mxu0 0
          %654 = vmatmul.mubr.bf16.gmra.mrb[0].mxu0 %v593
          %v655 = vpop.f32.mrb[0].mxu0
          %v656 = vadd.f32 0.0, %v655
          %v657 = vpop.f32.mrb[0].mxu0
          %v658 = vpop.f32.mrb[0].mxu0
          %v659 = vadd.f32 0.0, %v658
          %v660 = vpop.f32.mrb[0].mxu0
          %661 = vmatprep.mubr.bf16.mxu0 0
          %662 = vmatmul.mubr.bf16.gmra.mrb[0].mxu0 %v596
          %v663 = vpop.f32.mrb[0].mxu0
          %v664 = vadd.f32 0.0, %v663
          %v665 = vpop.f32.mrb[0].mxu0
          %v666 = vpop.f32.mrb[0].mxu0
          %v667 = vadd.f32 0.0, %v666
          %v668 = vpop.f32.mrb[0].mxu0
          %669 = vmatprep.mubr.bf16.mxu0 0
          %670 = vmatmul.mubr.bf16.gmra.mrb[0].mxu0 %v599
          %v671 = vpop.f32.mrb[0].mxu0
          %v672 = vadd.f32 0.0, %v671
          %v673 = vpop.f32.mrb[0].mxu0
          %v674 = vpop.f32.mrb[0].mxu0
          %v675 = vadd.f32 0.0, %v674
          %v676 = vpop.f32.mrb[0].mxu0
          %677 = vmatprep.mubr.bf16.mxu0 0
          %678 = vmatmul.mubr.bf16.gmra.mrb[0].mxu0 %v602
          %v679 = vpop.f32.mrb[0].mxu0
          %v680 = vadd.f32 0.0, %v679
          %v681 = vpop.f32.mrb[0].mxu0
          %v682 = vpop.f32.mrb[0].mxu0
          %v683 = vadd.f32 0.0, %v682
          %v684 = vpop.f32.mrb[0].mxu0
          %685 = vmatprep.mubr.bf16.mxu0 0
          %686 = vmatmul.mubr.bf16.gmra.mrb[0].mxu0 %v605
          %v687 = vpop.f32.mrb[0].mxu0
          %v688 = vadd.f32 0.0, %v687
          %v689 = vpop.f32.mrb[0].mxu0
          %v690 = vpop.f32.mrb[0].mxu0
          %v691 = vadd.f32 0.0, %v690
          %v692 = vpop.f32.mrb[0].mxu0
          %693 = vmatprep.mubr.bf16.mxu0 0
          %694 = vmatmul.mubr.bf16.gmra.mrb[0].mxu0 %v608
          %v695 = vpop.f32.mrb[0].mxu0
          %v696 = vadd.f32 0.0, %v695
          %v697 = vpop.f32.mrb[0].mxu0
          %v698 = vpop.f32.mrb[0].mxu0
          %v699 = vadd.f32 0.0, %v698
          %v700 = vpop.f32.mrb[0].mxu0
          %701 = vmatprep.mubr.bf16.mxu0 0
          %702 = vmatmul.mubr.bf16.gmra.mrb[0].mxu0 %v611
          %v703 = vpop.f32.mrb[0].mxu0
          %v704 = vadd.f32 0.0, %v703
          %v705 = vpop.f32.mrb[0].mxu0
          %v706 = vpop.f32.mrb[0].mxu0
          %v707 = vadd.f32 0.0, %v706
          %v708 = vpop.f32.mrb[0].mxu0
          %709 = vdwg.mxu0
          %s710 = scalar_lea.vmem [#allocation10], %s290
          %711 = vst [vmem:[%s710] sm:$0xff] %v648
          %712 = vst [vmem:[%s710 + $0x8] sm:$0xff] %v651
          %713 = vst [vmem:[%s710 + $0x10] sm:$0xff] %v656
          %714 = vst [vmem:[%s710 + $0x18] sm:$0xff] %v659
          %715 = vst [vmem:[%s710 + $0x20] sm:$0xff] %v664
          %716 = vst [vmem:[%s710 + $0x28] sm:$0xff] %v667
          %717 = vst [vmem:[%s710 + $0x30] sm:$0xff] %v672
          %718 = vst [vmem:[%s710 + $0x38] sm:$0xff] %v675
          %719 = vst [vmem:[%s710 + $0x40] sm:$0xff] %v680
          %720 = vst [vmem:[%s710 + $0x48] sm:$0xff] %v683
          %721 = vst [vmem:[%s710 + $0x50] sm:$0xff] %v688
          %722 = vst [vmem:[%s710 + $0x58] sm:$0xff] %v691
          %723 = vst [vmem:[%s710 + $0x60] sm:$0xff] %v696
          %724 = vst [vmem:[%s710 + $0x68] sm:$0xff] %v699
          %725 = vst [vmem:[%s710 + $0x70] sm:$0xff] %v704
          %726 = vst [vmem:[%s710 + $0x78] sm:$0xff] %v707
        $region52: #{tpu_custom_call.1} parent=35 // pred_fallthru
          _
        %p727 = scmp.eq.s32.totalorder %s26, 1
        // Predicated region
        $region53: #{tpu_custom_call.1} parent=35 // pred_check
          %p728 = pneg %p727
        $region54: #{tpu_custom_call.1} parent=35 // pred_check_branch
          %730 = sbr.rel (%p728) target = $region56
        $region55: #{tpu_custom_call.1} parent=35 // pred_region
          %v731 = vld [vmem:[#allocation2] sm:$0xff]
          %v732 = vld [vmem:[#allocation2 + $0x8] sm:$0xff]
          %v733 = vld [vmem:[#allocation2 + $0x10] sm:$0xff]
          %v734 = vld [vmem:[#allocation2 + $0x18] sm:$0xff]
          %v735 = vld [vmem:[#allocation2 + $0x20] sm:$0xff]
          %v736 = vld [vmem:[#allocation2 + $0x28] sm:$0xff]
          %v737 = vld [vmem:[#allocation2 + $0x30] sm:$0xff]
          %v738 = vld [vmem:[#allocation2 + $0x38] sm:$0xff]
          %v739 = vld [vmem:[#allocation2 + $0x40] sm:$0xff]
          %v740 = vld [vmem:[#allocation2 + $0x48] sm:$0xff]
          %v741 = vld [vmem:[#allocation2 + $0x50] sm:$0xff]
          %v742 = vld [vmem:[#allocation2 + $0x58] sm:$0xff]
          %v743 = vld [vmem:[#allocation2 + $0x60] sm:$0xff]
          %v744 = vld [vmem:[#allocation2 + $0x68] sm:$0xff]
          %v745 = vld [vmem:[#allocation2 + $0x70] sm:$0xff]
          %v746 = vld [vmem:[#allocation2 + $0x78] sm:$0xff]
          %v747 = vld [vmem:[%s254] sm:$0xff]
          %v748 = vld [vmem:[%s254 + $0x8] sm:$0xff]
          %v749 = vld [vmem:[%s254 + $0x10] sm:$0xff]
          %v750 = vld [vmem:[%s254 + $0x18] sm:$0xff]
          %v751 = vld [vmem:[%s254 + $0x20] sm:$0xff]
          %v752 = vld [vmem:[%s254 + $0x28] sm:$0xff]
          %v753 = vld [vmem:[%s254 + $0x30] sm:$0xff]
          %v754 = vld [vmem:[%s254 + $0x38] sm:$0xff]
          %v755 = vld [vmem:[%s254 + $0x40] sm:$0xff]
          %v756 = vld [vmem:[%s254 + $0x48] sm:$0xff]
          %v757 = vld [vmem:[%s254 + $0x50] sm:$0xff]
          %v758 = vld [vmem:[%s254 + $0x58] sm:$0xff]
          %v759 = vld [vmem:[%s254 + $0x60] sm:$0xff]
          %v760 = vld [vmem:[%s254 + $0x68] sm:$0xff]
          %v761 = vld [vmem:[%s254 + $0x70] sm:$0xff]
          %v762 = vld [vmem:[%s254 + $0x78] sm:$0xff]
          %v763 = vld [vmem:[%s254 + $0x80] sm:$0xff]
          %v764 = vld [vmem:[%s254 + $0x88] sm:$0xff]
          %v765 = vld [vmem:[%s254 + $0x90] sm:$0xff]
          %v766 = vld [vmem:[%s254 + $0x98] sm:$0xff]
          %v767 = vld [vmem:[%s254 + $0xa0] sm:$0xff]
          %v768 = vld [vmem:[%s254 + $0xa8] sm:$0xff]
          %v769 = vld [vmem:[%s254 + $0xb0] sm:$0xff]
          %v770 = vld [vmem:[%s254 + $0xb8] sm:$0xff]
          %v771 = vld [vmem:[%s254 + $0xc0] sm:$0xff]
          %v772 = vld [vmem:[%s254 + $0xc8] sm:$0xff]
          %v773 = vld [vmem:[%s254 + $0xd0] sm:$0xff]
          %v774 = vld [vmem:[%s254 + $0xd8] sm:$0xff]
          %v775 = vld [vmem:[%s254 + $0xe0] sm:$0xff]
          %v776 = vld [vmem:[%s254 + $0xe8] sm:$0xff]
          %v777 = vld [vmem:[%s254 + $0xf0] sm:$0xff]
          %v778 = vld [vmem:[%s254 + $0xf8] sm:$0xff]
          %v811 = vunpack.c.l.b16 %v747
          %v812 = vunpack.c.h.b16 %v747
          %v813 = vunpack.c.l.b16 %v748
          %v814 = vunpack.c.h.b16 %v748
          %v815 = vunpack.c.l.b16 %v749
          %v816 = vunpack.c.h.b16 %v749
          %v817 = vunpack.c.l.b16 %v750
          %v818 = vunpack.c.h.b16 %v750
          %v819 = vunpack.c.l.b16 %v751
          %v820 = vunpack.c.h.b16 %v751
          %v821 = vunpack.c.l.b16 %v752
          %v822 = vunpack.c.h.b16 %v752
          %v823 = vunpack.c.l.b16 %v753
          %v824 = vunpack.c.h.b16 %v753
          %v825 = vunpack.c.l.b16 %v754
          %v826 = vunpack.c.h.b16 %v754
          %v827 = vunpack.c.l.b16 %v755
          %v828 = vunpack.c.h.b16 %v755
          %v829 = vunpack.c.l.b16 %v756
          %v830 = vunpack.c.h.b16 %v756
          %v831 = vunpack.c.l.b16 %v757
          %v832 = vunpack.c.h.b16 %v757
          %v833 = vunpack.c.l.b16 %v758
          %v834 = vunpack.c.h.b16 %v758
          %v835 = vunpack.c.l.b16 %v759
          %v836 = vunpack.c.h.b16 %v759
          %v837 = vunpack.c.l.b16 %v760
          %v838 = vunpack.c.h.b16 %v760
          %v839 = vunpack.c.l.b16 %v761
          %v840 = vunpack.c.h.b16 %v761
          %v841 = vunpack.c.l.b16 %v762
          %v842 = vunpack.c.h.b16 %v762
          %v843 = vunpack.c.l.b16 %v763
          %v844 = vunpack.c.h.b16 %v763
          %v845 = vunpack.c.l.b16 %v764
          %v846 = vunpack.c.h.b16 %v764
          %v847 = vunpack.c.l.b16 %v765
          %v848 = vunpack.c.h.b16 %v765
          %v849 = vunpack.c.l.b16 %v766
          %v850 = vunpack.c.h.b16 %v766
          %v851 = vunpack.c.l.b16 %v767
          %v852 = vunpack.c.h.b16 %v767
          %v853 = vunpack.c.l.b16 %v768
          %v854 = vunpack.c.h.b16 %v768
          %v855 = vunpack.c.l.b16 %v769
          %v856 = vunpack.c.h.b16 %v769
          %v857 = vunpack.c.l.b16 %v770
          %v858 = vunpack.c.h.b16 %v770
          %v859 = vunpack.c.l.b16 %v771
          %v860 = vunpack.c.h.b16 %v771
          %v861 = vunpack.c.l.b16 %v772
          %v862 = vunpack.c.h.b16 %v772
          %v863 = vunpack.c.l.b16 %v773
          %v864 = vunpack.c.h.b16 %v773
          %v865 = vunpack.c.l.b16 %v774
          %v866 = vunpack.c.h.b16 %v774
          %v867 = vunpack.c.l.b16 %v775
          %v868 = vunpack.c.h.b16 %v775
          %v869 = vunpack.c.l.b16 %v776
          %v870 = vunpack.c.h.b16 %v776
          %v871 = vunpack.c.l.b16 %v777
          %v872 = vunpack.c.h.b16 %v777
          %v873 = vunpack.c.l.b16 %v778
          %v874 = vunpack.c.h.b16 %v778
          %v875 = vpack.c.b16 %v813, %v811
          %v876 = vpack.c.b16 %v814, %v812
          %v877 = vpack.c.b16 %v817, %v815
          %v878 = vpack.c.b16 %v818, %v816
          %v879 = vpack.c.b16 %v821, %v819
          %v880 = vpack.c.b16 %v822, %v820
          %v881 = vpack.c.b16 %v825, %v823
          %v882 = vpack.c.b16 %v826, %v824
          %v883 = vpack.c.b16 %v829, %v827
          %v884 = vpack.c.b16 %v830, %v828
          %v885 = vpack.c.b16 %v833, %v831
          %v886 = vpack.c.b16 %v834, %v832
          %v887 = vpack.c.b16 %v837, %v835
          %v888 = vpack.c.b16 %v838, %v836
          %v889 = vpack.c.b16 %v841, %v839
          %v890 = vpack.c.b16 %v842, %v840
          %v891 = vpack.c.b16 %v845, %v843
          %v892 = vpack.c.b16 %v846, %v844
          %v893 = vpack.c.b16 %v849, %v847
          %v894 = vpack.c.b16 %v850, %v848
          %v895 = vpack.c.b16 %v853, %v851
          %v896 = vpack.c.b16 %v854, %v852
          %v897 = vpack.c.b16 %v857, %v855
          %v898 = vpack.c.b16 %v858, %v856
          %v899 = vpack.c.b16 %v861, %v859
          %v900 = vpack.c.b16 %v862, %v860
          %v901 = vpack.c.b16 %v865, %v863
          %v902 = vpack.c.b16 %v866, %v864
          %v903 = vpack.c.b16 %v869, %v867
          %v904 = vpack.c.b16 %v870, %v868
          %v905 = vpack.c.b16 %v873, %v871
          %v906 = vpack.c.b16 %v874, %v872
          %939 = vmatprep.subr.bf16.mxu0 0
          %940 = vmatpush1.bf16.msra.mxu0 %v731
          %941 = vmatprep.subr.bf16.mxu0 0
          %942 = vmatpush1.bf16.msra.mxu0 %v732
          %943 = vmatprep.subr.bf16.mxu0 0
          %944 = vmatpush1.bf16.msra.mxu0 %v733
          %945 = vmatprep.subr.bf16.mxu0 0
          %946 = vmatpush1.bf16.msra.mxu0 %v734
          %947 = vmatprep.subr.bf16.mxu0 0
          %948 = vmatpush1.bf16.msra.mxu0 %v735
          %949 = vmatprep.subr.bf16.mxu0 0
          %950 = vmatpush1.bf16.msra.mxu0 %v736
          %951 = vmatprep.subr.bf16.mxu0 0
          %952 = vmatpush1.bf16.msra.mxu0 %v737
          %953 = vmatprep.subr.bf16.mxu0 0
          %954 = vmatpush1.bf16.msra.mxu0 %v738
          %955 = vmatprep.subr.bf16.mxu0 0
          %956 = vmatpush1.bf16.msra.mxu0 %v739
          %957 = vmatprep.subr.bf16.mxu0 0
          %958 = vmatpush1.bf16.msra.mxu0 %v740
          %959 = vmatprep.subr.bf16.mxu0 0
          %960 = vmatpush1.bf16.msra.mxu0 %v741
          %961 = vmatprep.subr.bf16.mxu0 0
          %962 = vmatpush1.bf16.msra.mxu0 %v742
          %963 = vmatprep.subr.bf16.mxu0 0
          %964 = vmatpush1.bf16.msra.mxu0 %v743
          %965 = vmatprep.subr.bf16.mxu0 0
          %966 = vmatpush1.bf16.msra.mxu0 %v744
          %967 = vmatprep.subr.bf16.mxu0 0
          %968 = vmatpush1.bf16.msra.mxu0 %v745
          %969 = vmatprep.subr.bf16.mxu0 0
          %970 = vmatpush1.bf16.msra.mxu0 %v746
          %971 = vmatprep.mubr.bf16.mxu0 %v876
          %972 = vmatmul.mubr.bf16.gmra.mrb[0].mxu0 %v875
          %v973 = vpop.f32.mrb[0].mxu0
          %v974 = vadd.f32 0.0, %v973
          %v975 = vpop.f32.mrb[0].mxu0
          %v976 = vpop.f32.mrb[0].mxu0
          %v977 = vadd.f32 0.0, %v976
          %v978 = vpop.f32.mrb[0].mxu0
          %979 = vmatprep.mubr.bf16.mxu0 %v878
          %980 = vmatmul.mubr.bf16.gmra.mrb[0].mxu0 %v877
          %v981 = vpop.f32.mrb[0].mxu0
          %v982 = vadd.f32 0.0, %v981
          %v983 = vpop.f32.mrb[0].mxu0
          %v984 = vpop.f32.mrb[0].mxu0
          %v985 = vadd.f32 0.0, %v984
          %v986 = vpop.f32.mrb[0].mxu0
          %987 = vmatprep.mubr.bf16.mxu0 %v880
          %988 = vmatmul.mubr.bf16.gmra.mrb[0].mxu0 %v879
          %v989 = vpop.f32.mrb[0].mxu0
          %v990 = vadd.f32 0.0, %v989
          %v991 = vpop.f32.mrb[0].mxu0
          %v992 = vpop.f32.mrb[0].mxu0
          %v993 = vadd.f32 0.0, %v992
          %v994 = vpop.f32.mrb[0].mxu0
          %995 = vmatprep.mubr.bf16.mxu0 %v882
          %996 = vmatmul.mubr.bf16.gmra.mrb[0].mxu0 %v881
          %v997 = vpop.f32.mrb[0].mxu0
          %v998 = vadd.f32 0.0, %v997
          %v999 = vpop.f32.mrb[0].mxu0
          %v1000 = vpop.f32.mrb[0].mxu0
          %v1001 = vadd.f32 0.0, %v1000
          %v1002 = vpop.f32.mrb[0].mxu0
          %1003 = vmatprep.mubr.bf16.mxu0 %v884
          %1004 = vmatmul.mubr.bf16.gmra.mrb[0].mxu0 %v883
          %v1005 = vpop.f32.mrb[0].mxu0
          %v1006 = vadd.f32 0.0, %v1005
          %v1007 = vpop.f32.mrb[0].mxu0
          %v1008 = vpop.f32.mrb[0].mxu0
          %v1009 = vadd.f32 0.0, %v1008
          %v1010 = vpop.f32.mrb[0].mxu0
          %1011 = vmatprep.mubr.bf16.mxu0 %v886
          %1012 = vmatmul.mubr.bf16.gmra.mrb[0].mxu0 %v885
          %v1013 = vpop.f32.mrb[0].mxu0
          %v1014 = vadd.f32 0.0, %v1013
          %v1015 = vpop.f32.mrb[0].mxu0
          %v1016 = vpop.f32.mrb[0].mxu0
          %v1017 = vadd.f32 0.0, %v1016
          %v1018 = vpop.f32.mrb[0].mxu0
          %1019 = vmatprep.mubr.bf16.mxu0 %v888
          %1020 = vmatmul.mubr.bf16.gmra.mrb[0].mxu0 %v887
          %v1021 = vpop.f32.mrb[0].mxu0
          %v1022 = vadd.f32 0.0, %v1021
          %v1023 = vpop.f32.mrb[0].mxu0
          %v1024 = vpop.f32.mrb[0].mxu0
          %v1025 = vadd.f32 0.0, %v1024
          %v1026 = vpop.f32.mrb[0].mxu0
          %1027 = vmatprep.mubr.bf16.mxu0 %v890
          %1028 = vmatmul.mubr.bf16.gmra.mrb[0].mxu0 %v889
          %v1029 = vpop.f32.mrb[0].mxu0
          %v1030 = vadd.f32 0.0, %v1029
          %v1031 = vpop.f32.mrb[0].mxu0
          %v1032 = vpop.f32.mrb[0].mxu0
          %v1033 = vadd.f32 0.0, %v1032
          %v1034 = vpop.f32.mrb[0].mxu0
          %1035 = vmatprep.mubr.bf16.mxu0 %v892
          %1036 = vmatmul.mubr.bf16.gmra.mrb[0].mxu0 %v891
          %v1037 = vpop.f32.mrb[0].mxu0
          %v1038 = vadd.f32 0.0, %v1037
          %v1039 = vpop.f32.mrb[0].mxu0
          %v1040 = vpop.f32.mrb[0].mxu0
          %v1041 = vadd.f32 0.0, %v1040
          %v1042 = vpop.f32.mrb[0].mxu0
          %1043 = vmatprep.mubr.bf16.mxu0 %v894
          %1044 = vmatmul.mubr.bf16.gmra.mrb[0].mxu0 %v893
          %v1045 = vpop.f32.mrb[0].mxu0
          %v1046 = vadd.f32 0.0, %v1045
          %v1047 = vpop.f32.mrb[0].mxu0
          %v1048 = vpop.f32.mrb[0].mxu0
          %v1049 = vadd.f32 0.0, %v1048
          %v1050 = vpop.f32.mrb[0].mxu0
          %1051 = vmatprep.mubr.bf16.mxu0 %v896
          %1052 = vmatmul.mubr.bf16.gmra.mrb[0].mxu0 %v895
          %v1053 = vpop.f32.mrb[0].mxu0
          %v1054 = vadd.f32 0.0, %v1053
          %v1055 = vpop.f32.mrb[0].mxu0
          %v1056 = vpop.f32.mrb[0].mxu0
          %v1057 = vadd.f32 0.0, %v1056
          %v1058 = vpop.f32.mrb[0].mxu0
          %1059 = vmatprep.mubr.bf16.mxu0 %v898
          %1060 = vmatmul.mubr.bf16.gmra.mrb[0].mxu0 %v897
          %v1061 = vpop.f32.mrb[0].mxu0
          %v1062 = vadd.f32 0.0, %v1061
          %v1063 = vpop.f32.mrb[0].mxu0
          %v1064 = vpop.f32.mrb[0].mxu0
          %v1065 = vadd.f32 0.0, %v1064
          %v1066 = vpop.f32.mrb[0].mxu0
          %1067 = vmatprep.mubr.bf16.mxu0 %v900
          %1068 = vmatmul.mubr.bf16.gmra.mrb[0].mxu0 %v899
          %v1069 = vpop.f32.mrb[0].mxu0
          %v1070 = vadd.f32 0.0, %v1069
          %v1071 = vpop.f32.mrb[0].mxu0
          %v1072 = vpop.f32.mrb[0].mxu0
          %v1073 = vadd.f32 0.0, %v1072
          %v1074 = vpop.f32.mrb[0].mxu0
          %1075 = vmatprep.mubr.bf16.mxu0 %v902
          %1076 = vmatmul.mubr.bf16.gmra.mrb[0].mxu0 %v901
          %v1077 = vpop.f32.mrb[0].mxu0
          %v1078 = vadd.f32 0.0, %v1077
          %v1079 = vpop.f32.mrb[0].mxu0
          %v1080 = vpop.f32.mrb[0].mxu0
          %v1081 = vadd.f32 0.0, %v1080
          %v1082 = vpop.f32.mrb[0].mxu0
          %1083 = vmatprep.mubr.bf16.mxu0 %v904
          %1084 = vmatmul.mubr.bf16.gmra.mrb[0].mxu0 %v903
          %v1085 = vpop.f32.mrb[0].mxu0
          %v1086 = vadd.f32 0.0, %v1085
          %v1087 = vpop.f32.mrb[0].mxu0
          %v1088 = vpop.f32.mrb[0].mxu0
          %v1089 = vadd.f32 0.0, %v1088
          %v1090 = vpop.f32.mrb[0].mxu0
          %1091 = vmatprep.mubr.bf16.mxu0 %v906
          %1092 = vmatmul.mubr.bf16.gmra.mrb[0].mxu0 %v905
          %v1093 = vpop.f32.mrb[0].mxu0
          %v1094 = vadd.f32 0.0, %v1093
          %v1095 = vpop.f32.mrb[0].mxu0
          %v1096 = vpop.f32.mrb[0].mxu0
          %v1097 = vadd.f32 0.0, %v1096
          %v1098 = vpop.f32.mrb[0].mxu0
          %1099 = vdwg.mxu0
          %v1100 = vmax.f32 %v974, 0.0
          %v1101 = vmax.f32 %v977, 0.0
          %v1102 = vmax.f32 %v982, 0.0
          %v1103 = vmax.f32 %v985, 0.0
          %v1104 = vmax.f32 %v990, 0.0
          %v1105 = vmax.f32 %v993, 0.0
          %v1106 = vmax.f32 %v998, 0.0
          %v1107 = vmax.f32 %v1001, 0.0
          %v1108 = vmax.f32 %v1006, 0.0
          %v1109 = vmax.f32 %v1009, 0.0
          %v1110 = vmax.f32 %v1014, 0.0
          %v1111 = vmax.f32 %v1017, 0.0
          %v1112 = vmax.f32 %v1022, 0.0
          %v1113 = vmax.f32 %v1025, 0.0
          %v1114 = vmax.f32 %v1030, 0.0
          %v1115 = vmax.f32 %v1033, 0.0
          %v1116 = vmax.f32 %v1038, 0.0
          %v1117 = vmax.f32 %v1041, 0.0
          %v1118 = vmax.f32 %v1046, 0.0
          %v1119 = vmax.f32 %v1049, 0.0
          %v1120 = vmax.f32 %v1054, 0.0
          %v1121 = vmax.f32 %v1057, 0.0
          %v1122 = vmax.f32 %v1062, 0.0
          %v1123 = vmax.f32 %v1065, 0.0
          %v1124 = vmax.f32 %v1070, 0.0
          %v1125 = vmax.f32 %v1073, 0.0
          %v1126 = vmax.f32 %v1078, 0.0
          %v1127 = vmax.f32 %v1081, 0.0
          %v1128 = vmax.f32 %v1086, 0.0
          %v1129 = vmax.f32 %v1089, 0.0
          %v1130 = vmax.f32 %v1094, 0.0
          %v1131 = vmax.f32 %v1097, 0.0
          %1148 = vrot.lane.b32.xlu0 %v1116, 64
          %v1149 = vpop.permute.xlu0 %1148
          %1150 = vrot.lane.b32.xlu0 %v1117, 64
          %v1151 = vpop.permute.xlu0 %1150
          %1152 = vrot.lane.b32.xlu0 %v1118, 64
          %v1153 = vpop.permute.xlu0 %1152
          %1154 = vrot.lane.b32.xlu0 %v1119, 64
          %v1155 = vpop.permute.xlu0 %1154
          %1156 = vrot.lane.b32.xlu0 %v1120, 64
          %v1157 = vpop.permute.xlu0 %1156
          %1158 = vrot.lane.b32.xlu0 %v1121, 64
          %v1159 = vpop.permute.xlu0 %1158
          %1160 = vrot.lane.b32.xlu0 %v1122, 64
          %v1161 = vpop.permute.xlu0 %1160
          %1162 = vrot.lane.b32.xlu0 %v1123, 64
          %v1163 = vpop.permute.xlu0 %1162
          %1164 = vrot.lane.b32.xlu0 %v1124, 64
          %v1165 = vpop.permute.xlu0 %1164
          %1166 = vrot.lane.b32.xlu0 %v1125, 64
          %v1167 = vpop.permute.xlu0 %1166
          %1168 = vrot.lane.b32.xlu0 %v1126, 64
          %v1169 = vpop.permute.xlu0 %1168
          %1170 = vrot.lane.b32.xlu0 %v1127, 64
          %v1171 = vpop.permute.xlu0 %1170
          %1172 = vrot.lane.b32.xlu0 %v1128, 64
          %v1173 = vpop.permute.xlu0 %1172
          %1174 = vrot.lane.b32.xlu0 %v1129, 64
          %v1175 = vpop.permute.xlu0 %1174
          %1176 = vrot.lane.b32.xlu0 %v1130, 64
          %v1177 = vpop.permute.xlu0 %1176
          %1178 = vrot.lane.b32.xlu0 %v1131, 64
          %v1179 = vpop.permute.xlu0 %1178
          %vm1196 = vcmask 523264
          %v1197 = vsel %vm1196, %v1100, %v1149
          %v1198 = vsel %vm1196, %v1101, %v1151
          %v1199 = vsel %vm1196, %v1102, %v1153
          %v1200 = vsel %vm1196, %v1103, %v1155
          %v1201 = vsel %vm1196, %v1104, %v1157
          %v1202 = vsel %vm1196, %v1105, %v1159
          %v1203 = vsel %vm1196, %v1106, %v1161
          %v1204 = vsel %vm1196, %v1107, %v1163
          %v1205 = vsel %vm1196, %v1108, %v1165
          %v1206 = vsel %vm1196, %v1109, %v1167
          %v1207 = vsel %vm1196, %v1110, %v1169
          %v1208 = vsel %vm1196, %v1111, %v1171
          %v1209 = vsel %vm1196, %v1112, %v1173
          %v1210 = vsel %vm1196, %v1113, %v1175
          %v1211 = vsel %vm1196, %v1114, %v1177
          %v1212 = vsel %vm1196, %v1115, %v1179
          %v1213 = vpack.c.bf16 %v1198, %v1197
          %v1214 = vpack.c.bf16 %v1200, %v1199
          %v1215 = vpack.c.bf16 %v1202, %v1201
          %v1216 = vpack.c.bf16 %v1204, %v1203
          %v1217 = vpack.c.bf16 %v1206, %v1205
          %v1218 = vpack.c.bf16 %v1208, %v1207
          %v1219 = vpack.c.bf16 %v1210, %v1209
          %v1220 = vpack.c.bf16 %v1212, %v1211
          %s1221 = sshra.s32 %s290, 4
          %s1222 = sand.u32 %s290, 15
          %s1223 = smul.addr %s1221, 8
          %s1224 = scalar_lea.vmem [#allocation3], %s1223
          %1225 = vst [vmem:[%s1224] sm:$0xff] %v1213
          %1226 = vst [vmem:[%s1224 + $0x8] sm:$0xff] %v1214
          %1227 = vst [vmem:[%s1224 + $0x10] sm:$0xff] %v1215
          %1228 = vst [vmem:[%s1224 + $0x18] sm:$0xff] %v1216
          %1229 = vst [vmem:[%s1224 + $0x20] sm:$0xff] %v1217
          %1230 = vst [vmem:[%s1224 + $0x28] sm:$0xff] %v1218
          %1231 = vst [vmem:[%s1224 + $0x30] sm:$0xff] %v1219
          %1232 = vst [vmem:[%s1224 + $0x38] sm:$0xff] %v1220
          %v1233 = vld [vmem:[#allocation9 + $0x20] sm:$0xf]
          %v1234 = vld [vmem:[#allocation9 + $0x24] sm:$0xf]
          %v1235 = vld [vmem:[#allocation9 + $0x28] sm:$0xf]
          %v1236 = vld [vmem:[#allocation9 + $0x2c] sm:$0xf]
          %v1237 = vld [vmem:[#allocation9 + $0x30] sm:$0xf]
          %v1238 = vld [vmem:[#allocation9 + $0x34] sm:$0xf]
          %v1239 = vld [vmem:[#allocation9 + $0x38] sm:$0xf]
          %v1240 = vld [vmem:[#allocation9 + $0x3c] sm:$0xf]
          %v1241 = vld [vmem:[#allocation9 + $0x40] sm:$0xf]
          %v1242 = vld [vmem:[#allocation9 + $0x44] sm:$0xf]
          %v1243 = vld [vmem:[#allocation9 + $0x48] sm:$0xf]
          %v1244 = vld [vmem:[#allocation9 + $0x4c] sm:$0xf]
          %v1245 = vld [vmem:[#allocation9 + $0x50] sm:$0xf]
          %v1246 = vld [vmem:[#allocation9 + $0x54] sm:$0xf]
          %v1247 = vld [vmem:[#allocation9 + $0x58] sm:$0xf]
          %v1248 = vld [vmem:[#allocation9 + $0x5c] sm:$0xf]
          %v1265 = vunpack.c.l.b16 %v1233
          %v1266 = vunpack.c.l.b16 %v1234
          %v1267 = vunpack.c.l.b16 %v1235
          %v1268 = vunpack.c.l.b16 %v1236
          %v1269 = vunpack.c.l.b16 %v1237
          %v1270 = vunpack.c.l.b16 %v1238
          %v1271 = vunpack.c.l.b16 %v1239
          %v1272 = vunpack.c.l.b16 %v1240
          %v1273 = vunpack.c.l.b16 %v1241
          %v1274 = vunpack.c.l.b16 %v1242
          %v1275 = vunpack.c.l.b16 %v1243
          %v1276 = vunpack.c.l.b16 %v1244
          %v1277 = vunpack.c.l.b16 %v1245
          %v1278 = vunpack.c.l.b16 %v1246
          %v1279 = vunpack.c.l.b16 %v1247
          %v1280 = vunpack.c.l.b16 %v1248
          %v1281 = vpack.c.b16 %v1266, %v1265
          %v1282 = vpack.c.b16 %v1268, %v1267
          %v1283 = vpack.c.b16 %v1270, %v1269
          %v1284 = vpack.c.b16 %v1272, %v1271
          %v1285 = vpack.c.b16 %v1274, %v1273
          %v1286 = vpack.c.b16 %v1276, %v1275
          %v1287 = vpack.c.b16 %v1278, %v1277
          %v1288 = vpack.c.b16 %v1280, %v1279
          %1297 = vmatprep.subr.bf16.mxu0 0
          %1298 = vmatpush1.bf16.msra.mxu0 %v1281
          %1299 = vmatprep.subr.bf16.mxu0 0
          %1300 = vmatpush1.bf16.msra.mxu0 %v1282
          %1301 = vmatprep.subr.bf16.mxu0 0
          %1302 = vmatpush1.bf16.msra.mxu0 %v1283
          %1303 = vmatprep.subr.bf16.mxu0 0
          %1304 = vmatpush1.bf16.msra.mxu0 %v1284
          %1305 = vmatprep.subr.bf16.mxu0 0
          %1306 = vmatpush1.bf16.msra.mxu0 %v1285
          %1307 = vmatprep.subr.bf16.mxu0 0
          %1308 = vmatpush1.bf16.msra.mxu0 %v1286
          %1309 = vmatprep.subr.bf16.mxu0 0
          %1310 = vmatpush1.bf16.msra.mxu0 %v1287
          %1311 = vmatprep.subr.bf16.mxu0 0
          %1312 = vmatpush1.bf16.msra.mxu0 %v1288
          %1313 = vmatprep.subr.bf16.mxu0 0
          %1314 = vmatpush1.bf16.msra.mxu0 0
          %1315 = vmatprep.subr.bf16.mxu0 0
          %1316 = vmatpush1.bf16.msra.mxu0 0
          %1317 = vmatprep.subr.bf16.mxu0 0
          %1318 = vmatpush1.bf16.msra.mxu0 0
          %1319 = vmatprep.subr.bf16.mxu0 0
          %1320 = vmatpush1.bf16.msra.mxu0 0
          %1321 = vmatprep.subr.bf16.mxu0 0
          %1322 = vmatpush1.bf16.msra.mxu0 0
          %1323 = vmatprep.subr.bf16.mxu0 0
          %1324 = vmatpush1.bf16.msra.mxu0 0
          %1325 = vmatprep.subr.bf16.mxu0 0
          %1326 = vmatpush1.bf16.msra.mxu0 0
          %1327 = vmatprep.subr.bf16.mxu0 0
          %1328 = vmatpush1.bf16.msra.mxu0 0
          %1329 = vmatprep.mubr.bf16.mxu0 0
          %1330 = vmatmul.mubr.bf16.gmra.mrb[0].mxu0 %v1213
          %v1331 = vpop.f32.mrb[0].mxu0
          %v1332 = vadd.f32 0.0, %v1331
          %v1333 = vpop.f32.mrb[0].mxu0
          %v1334 = vpop.f32.mrb[0].mxu0
          %v1335 = vadd.f32 0.0, %v1334
          %v1336 = vpop.f32.mrb[0].mxu0
          %1337 = vmatprep.mubr.bf16.mxu0 0
          %1338 = vmatmul.mubr.bf16.gmra.mrb[0].mxu0 %v1214
          %v1339 = vpop.f32.mrb[0].mxu0
          %v1340 = vadd.f32 0.0, %v1339
          %v1341 = vpop.f32.mrb[0].mxu0
          %v1342 = vpop.f32.mrb[0].mxu0
          %v1343 = vadd.f32 0.0, %v1342
          %v1344 = vpop.f32.mrb[0].mxu0
          %1345 = vmatprep.mubr.bf16.mxu0 0
          %1346 = vmatmul.mubr.bf16.gmra.mrb[0].mxu0 %v1215
          %v1347 = vpop.f32.mrb[0].mxu0
          %v1348 = vadd.f32 0.0, %v1347
          %v1349 = vpop.f32.mrb[0].mxu0
          %v1350 = vpop.f32.mrb[0].mxu0
          %v1351 = vadd.f32 0.0, %v1350
          %v1352 = vpop.f32.mrb[0].mxu0
          %1353 = vmatprep.mubr.bf16.mxu0 0
          %1354 = vmatmul.mubr.bf16.gmra.mrb[0].mxu0 %v1216
          %v1355 = vpop.f32.mrb[0].mxu0
          %v1356 = vadd.f32 0.0, %v1355
          %v1357 = vpop.f32.mrb[0].mxu0
          %v1358 = vpop.f32.mrb[0].mxu0
          %v1359 = vadd.f32 0.0, %v1358
          %v1360 = vpop.f32.mrb[0].mxu0
          %1361 = vmatprep.mubr.bf16.mxu0 0
          %1362 = vmatmul.mubr.bf16.gmra.mrb[0].mxu0 %v1217
          %v1363 = vpop.f32.mrb[0].mxu0
          %v1364 = vadd.f32 0.0, %v1363
          %v1365 = vpop.f32.mrb[0].mxu0
          %v1366 = vpop.f32.mrb[0].mxu0
          %v1367 = vadd.f32 0.0, %v1366
          %v1368 = vpop.f32.mrb[0].mxu0
          %1369 = vmatprep.mubr.bf16.mxu0 0
          %1370 = vmatmul.mubr.bf16.gmra.mrb[0].mxu0 %v1218
          %v1371 = vpop.f32.mrb[0].mxu0
          %v1372 = vadd.f32 0.0, %v1371
          %v1373 = vpop.f32.mrb[0].mxu0
          %v1374 = vpop.f32.mrb[0].mxu0
          %v1375 = vadd.f32 0.0, %v1374
          %v1376 = vpop.f32.mrb[0].mxu0
          %1377 = vmatprep.mubr.bf16.mxu0 0
          %1378 = vmatmul.mubr.bf16.gmra.mrb[0].mxu0 %v1219
          %v1379 = vpop.f32.mrb[0].mxu0
          %v1380 = vadd.f32 0.0, %v1379
          %v1381 = vpop.f32.mrb[0].mxu0
          %v1382 = vpop.f32.mrb[0].mxu0
          %v1383 = vadd.f32 0.0, %v1382
          %v1384 = vpop.f32.mrb[0].mxu0
          %1385 = vmatprep.mubr.bf16.mxu0 0
          %1386 = vmatmul.mubr.bf16.gmra.mrb[0].mxu0 %v1220
          %v1387 = vpop.f32.mrb[0].mxu0
          %v1388 = vadd.f32 0.0, %v1387
          %v1389 = vpop.f32.mrb[0].mxu0
          %v1390 = vpop.f32.mrb[0].mxu0
          %v1391 = vadd.f32 0.0, %v1390
          %v1392 = vpop.f32.mrb[0].mxu0
          %1393 = vdwg.mxu0
          %s1394 = scalar_lea.vmem [#allocation10], %s290
          %v1395 = vld [vmem:[%s1394] sm:$0xff]
          %v1396 = vld [vmem:[%s1394 + $0x8] sm:$0xff]
          %v1397 = vld [vmem:[%s1394 + $0x10] sm:$0xff]
          %v1398 = vld [vmem:[%s1394 + $0x18] sm:$0xff]
          %v1399 = vld [vmem:[%s1394 + $0x20] sm:$0xff]
          %v1400 = vld [vmem:[%s1394 + $0x28] sm:$0xff]
          %v1401 = vld [vmem:[%s1394 + $0x30] sm:$0xff]
          %v1402 = vld [vmem:[%s1394 + $0x38] sm:$0xff]
          %v1403 = vld [vmem:[%s1394 + $0x40] sm:$0xff]
          %v1404 = vld [vmem:[%s1394 + $0x48] sm:$0xff]
          %v1405 = vld [vmem:[%s1394 + $0x50] sm:$0xff]
          %v1406 = vld [vmem:[%s1394 + $0x58] sm:$0xff]
          %v1407 = vld [vmem:[%s1394 + $0x60] sm:$0xff]
          %v1408 = vld [vmem:[%s1394 + $0x68] sm:$0xff]
          %v1409 = vld [vmem:[%s1394 + $0x70] sm:$0xff]
          %v1410 = vld [vmem:[%s1394 + $0x78] sm:$0xff]
          %v1411 = vadd.f32 %v1395, %v1332
          %v1412 = vadd.f32 %v1396, %v1335
          %v1413 = vadd.f32 %v1397, %v1340
          %v1414 = vadd.f32 %v1398, %v1343
          %v1415 = vadd.f32 %v1399, %v1348
          %v1416 = vadd.f32 %v1400, %v1351
          %v1417 = vadd.f32 %v1401, %v1356
          %v1418 = vadd.f32 %v1402, %v1359
          %v1419 = vadd.f32 %v1403, %v1364
          %v1420 = vadd.f32 %v1404, %v1367
          %v1421 = vadd.f32 %v1405, %v1372
          %v1422 = vadd.f32 %v1406, %v1375
          %v1423 = vadd.f32 %v1407, %v1380
          %v1424 = vadd.f32 %v1408, %v1383
          %v1425 = vadd.f32 %v1409, %v1388
          %v1426 = vadd.f32 %v1410, %v1391
          %1427 = vst [vmem:[%s1394] sm:$0xff] %v1411
          %1428 = vst [vmem:[%s1394 + $0x8] sm:$0xff] %v1412
          %1429 = vst [vmem:[%s1394 + $0x10] sm:$0xff] %v1413
          %1430 = vst [vmem:[%s1394 + $0x18] sm:$0xff] %v1414
          %1431 = vst [vmem:[%s1394 + $0x20] sm:$0xff] %v1415
          %1432 = vst [vmem:[%s1394 + $0x28] sm:$0xff] %v1416
          %1433 = vst [vmem:[%s1394 + $0x30] sm:$0xff] %v1417
          %1434 = vst [vmem:[%s1394 + $0x38] sm:$0xff] %v1418
          %1435 = vst [vmem:[%s1394 + $0x40] sm:$0xff] %v1419
          %1436 = vst [vmem:[%s1394 + $0x48] sm:$0xff] %v1420
          %1437 = vst [vmem:[%s1394 + $0x50] sm:$0xff] %v1421
          %1438 = vst [vmem:[%s1394 + $0x58] sm:$0xff] %v1422
          %1439 = vst [vmem:[%s1394 + $0x60] sm:$0xff] %v1423
          %1440 = vst [vmem:[%s1394 + $0x68] sm:$0xff] %v1424
          %1441 = vst [vmem:[%s1394 + $0x70] sm:$0xff] %v1425
          %1442 = vst [vmem:[%s1394 + $0x78] sm:$0xff] %v1426
        $region56: #{tpu_custom_call.1} parent=35 // pred_fallthru
          _
        %p1443 = scmp.eq.s32.totalorder %s26, 2
        // Predicated region
        $region57: #{tpu_custom_call.1} parent=35 // pred_check
          %p1444 = pneg %p1443
        $region58: #{tpu_custom_call.1} parent=35 // pred_check_branch
          %1446 = sbr.rel (%p1444) target = $region60
        $region59: #{tpu_custom_call.1} parent=35 // pred_region
          %v1447 = vld [vmem:[#allocation3] sm:$0xff]
          %v1448 = vld [vmem:[#allocation3 + $0x8] sm:$0xff]
          %v1449 = vld [vmem:[#allocation3 + $0x10] sm:$0xff]
          %v1450 = vld [vmem:[#allocation3 + $0x18] sm:$0xff]
          %v1451 = vld [vmem:[#allocation3 + $0x20] sm:$0xff]
          %v1452 = vld [vmem:[#allocation3 + $0x28] sm:$0xff]
          %v1453 = vld [vmem:[#allocation3 + $0x30] sm:$0xff]
          %v1454 = vld [vmem:[#allocation3 + $0x38] sm:$0xff]
          %v1455 = vld [vmem:[#allocation3 + $0x40] sm:$0xff]
          %v1456 = vld [vmem:[#allocation3 + $0x48] sm:$0xff]
          %v1457 = vld [vmem:[#allocation3 + $0x50] sm:$0xff]
          %v1458 = vld [vmem:[#allocation3 + $0x58] sm:$0xff]
          %v1459 = vld [vmem:[#allocation3 + $0x60] sm:$0xff]
          %v1460 = vld [vmem:[#allocation3 + $0x68] sm:$0xff]
          %v1461 = vld [vmem:[#allocation3 + $0x70] sm:$0xff]
          %v1462 = vld [vmem:[#allocation3 + $0x78] sm:$0xff]
          %v1463 = vld [vmem:[%s254] sm:$0xff]
          %v1464 = vld [vmem:[%s254 + $0x8] sm:$0xff]
          %v1465 = vld [vmem:[%s254 + $0x10] sm:$0xff]
          %v1466 = vld [vmem:[%s254 + $0x18] sm:$0xff]
          %v1467 = vld [vmem:[%s254 + $0x20] sm:$0xff]
          %v1468 = vld [vmem:[%s254 + $0x28] sm:$0xff]
          %v1469 = vld [vmem:[%s254 + $0x30] sm:$0xff]
          %v1470 = vld [vmem:[%s254 + $0x38] sm:$0xff]
          %v1471 = vld [vmem:[%s254 + $0x40] sm:$0xff]
          %v1472 = vld [vmem:[%s254 + $0x48] sm:$0xff]
          %v1473 = vld [vmem:[%s254 + $0x50] sm:$0xff]
          %v1474 = vld [vmem:[%s254 + $0x58] sm:$0xff]
          %v1475 = vld [vmem:[%s254 + $0x60] sm:$0xff]
          %v1476 = vld [vmem:[%s254 + $0x68] sm:$0xff]
          %v1477 = vld [vmem:[%s254 + $0x70] sm:$0xff]
          %v1478 = vld [vmem:[%s254 + $0x78] sm:$0xff]
          %v1479 = vld [vmem:[%s254 + $0x80] sm:$0xff]
          %v1480 = vld [vmem:[%s254 + $0x88] sm:$0xff]
          %v1481 = vld [vmem:[%s254 + $0x90] sm:$0xff]
          %v1482 = vld [vmem:[%s254 + $0x98] sm:$0xff]
          %v1483 = vld [vmem:[%s254 + $0xa0] sm:$0xff]
          %v1484 = vld [vmem:[%s254 + $0xa8] sm:$0xff]
          %v1485 = vld [vmem:[%s254 + $0xb0] sm:$0xff]
          %v1486 = vld [vmem:[%s254 + $0xb8] sm:$0xff]
          %v1487 = vld [vmem:[%s254 + $0xc0] sm:$0xff]
          %v1488 = vld [vmem:[%s254 + $0xc8] sm:$0xff]
          %v1489 = vld [vmem:[%s254 + $0xd0] sm:$0xff]
          %v1490 = vld [vmem:[%s254 + $0xd8] sm:$0xff]
          %v1491 = vld [vmem:[%s254 + $0xe0] sm:$0xff]
          %v1492 = vld [vmem:[%s254 + $0xe8] sm:$0xff]
          %v1493 = vld [vmem:[%s254 + $0xf0] sm:$0xff]
          %v1494 = vld [vmem:[%s254 + $0xf8] sm:$0xff]
          %v1527 = vunpack.c.l.b16 %v1463
          %v1528 = vunpack.c.h.b16 %v1463
          %v1529 = vunpack.c.l.b16 %v1464
          %v1530 = vunpack.c.h.b16 %v1464
          %v1531 = vunpack.c.l.b16 %v1465
          %v1532 = vunpack.c.h.b16 %v1465
          %v1533 = vunpack.c.l.b16 %v1466
          %v1534 = vunpack.c.h.b16 %v1466
          %v1535 = vunpack.c.l.b16 %v1467
          %v1536 = vunpack.c.h.b16 %v1467
          %v1537 = vunpack.c.l.b16 %v1468
          %v1538 = vunpack.c.h.b16 %v1468
          %v1539 = vunpack.c.l.b16 %v1469
          %v1540 = vunpack.c.h.b16 %v1469
          %v1541 = vunpack.c.l.b16 %v1470
          %v1542 = vunpack.c.h.b16 %v1470
          %v1543 = vunpack.c.l.b16 %v1471
          %v1544 = vunpack.c.h.b16 %v1471
          %v1545 = vunpack.c.l.b16 %v1472
          %v1546 = vunpack.c.h.b16 %v1472
          %v1547 = vunpack.c.l.b16 %v1473
          %v1548 = vunpack.c.h.b16 %v1473
          %v1549 = vunpack.c.l.b16 %v1474
          %v1550 = vunpack.c.h.b16 %v1474
          %v1551 = vunpack.c.l.b16 %v1475
          %v1552 = vunpack.c.h.b16 %v1475
          %v1553 = vunpack.c.l.b16 %v1476
          %v1554 = vunpack.c.h.b16 %v1476
          %v1555 = vunpack.c.l.b16 %v1477
          %v1556 = vunpack.c.h.b16 %v1477
          %v1557 = vunpack.c.l.b16 %v1478
          %v1558 = vunpack.c.h.b16 %v1478
          %v1559 = vunpack.c.l.b16 %v1479
          %v1560 = vunpack.c.h.b16 %v1479
          %v1561 = vunpack.c.l.b16 %v1480
          %v1562 = vunpack.c.h.b16 %v1480
          %v1563 = vunpack.c.l.b16 %v1481
          %v1564 = vunpack.c.h.b16 %v1481
          %v1565 = vunpack.c.l.b16 %v1482
          %v1566 = vunpack.c.h.b16 %v1482
          %v1567 = vunpack.c.l.b16 %v1483
          %v1568 = vunpack.c.h.b16 %v1483
          %v1569 = vunpack.c.l.b16 %v1484
          %v1570 = vunpack.c.h.b16 %v1484
          %v1571 = vunpack.c.l.b16 %v1485
          %v1572 = vunpack.c.h.b16 %v1485
          %v1573 = vunpack.c.l.b16 %v1486
          %v1574 = vunpack.c.h.b16 %v1486
          %v1575 = vunpack.c.l.b16 %v1487
          %v1576 = vunpack.c.h.b16 %v1487
          %v1577 = vunpack.c.l.b16 %v1488
          %v1578 = vunpack.c.h.b16 %v1488
          %v1579 = vunpack.c.l.b16 %v1489
          %v1580 = vunpack.c.h.b16 %v1489
          %v1581 = vunpack.c.l.b16 %v1490
          %v1582 = vunpack.c.h.b16 %v1490
          %v1583 = vunpack.c.l.b16 %v1491
          %v1584 = vunpack.c.h.b16 %v1491
          %v1585 = vunpack.c.l.b16 %v1492
          %v1586 = vunpack.c.h.b16 %v1492
          %v1587 = vunpack.c.l.b16 %v1493
          %v1588 = vunpack.c.h.b16 %v1493
          %v1589 = vunpack.c.l.b16 %v1494
          %v1590 = vunpack.c.h.b16 %v1494
          %v1591 = vpack.c.b16 %v1529, %v1527
          %v1592 = vpack.c.b16 %v1530, %v1528
          %v1593 = vpack.c.b16 %v1533, %v1531
          %v1594 = vpack.c.b16 %v1534, %v1532
          %v1595 = vpack.c.b16 %v1537, %v1535
          %v1596 = vpack.c.b16 %v1538, %v1536
          %v1597 = vpack.c.b16 %v1541, %v1539
          %v1598 = vpack.c.b16 %v1542, %v1540
          %v1599 = vpack.c.b16 %v1545, %v1543
          %v1600 = vpack.c.b16 %v1546, %v1544
          %v1601 = vpack.c.b16 %v1549, %v1547
          %v1602 = vpack.c.b16 %v1550, %v1548
          %v1603 = vpack.c.b16 %v1553, %v1551
          %v1604 = vpack.c.b16 %v1554, %v1552
          %v1605 = vpack.c.b16 %v1557, %v1555
          %v1606 = vpack.c.b16 %v1558, %v1556
          %v1607 = vpack.c.b16 %v1561, %v1559
          %v1608 = vpack.c.b16 %v1562, %v1560
          %v1609 = vpack.c.b16 %v1565, %v1563
          %v1610 = vpack.c.b16 %v1566, %v1564
          %v1611 = vpack.c.b16 %v1569, %v1567
          %v1612 = vpack.c.b16 %v1570, %v1568
          %v1613 = vpack.c.b16 %v1573, %v1571
          %v1614 = vpack.c.b16 %v1574, %v1572
          %v1615 = vpack.c.b16 %v1577, %v1575
          %v1616 = vpack.c.b16 %v1578, %v1576
          %v1617 = vpack.c.b16 %v1581, %v1579
          %v1618 = vpack.c.b16 %v1582, %v1580
          %v1619 = vpack.c.b16 %v1585, %v1583
          %v1620 = vpack.c.b16 %v1586, %v1584
          %v1621 = vpack.c.b16 %v1589, %v1587
          %v1622 = vpack.c.b16 %v1590, %v1588
          %1655 = vmatprep.subr.bf16.mxu0 0
          %1656 = vmatpush1.bf16.msra.mxu0 %v1447
          %1657 = vmatprep.subr.bf16.mxu0 0
          %1658 = vmatpush1.bf16.msra.mxu0 %v1448
          %1659 = vmatprep.subr.bf16.mxu0 0
          %1660 = vmatpush1.bf16.msra.mxu0 %v1449
          %1661 = vmatprep.subr.bf16.mxu0 0
          %1662 = vmatpush1.bf16.msra.mxu0 %v1450
          %1663 = vmatprep.subr.bf16.mxu0 0
          %1664 = vmatpush1.bf16.msra.mxu0 %v1451
          %1665 = vmatprep.subr.bf16.mxu0 0
          %1666 = vmatpush1.bf16.msra.mxu0 %v1452
          %1667 = vmatprep.subr.bf16.mxu0 0
          %1668 = vmatpush1.bf16.msra.mxu0 %v1453
          %1669 = vmatprep.subr.bf16.mxu0 0
          %1670 = vmatpush1.bf16.msra.mxu0 %v1454
          %1671 = vmatprep.subr.bf16.mxu0 0
          %1672 = vmatpush1.bf16.msra.mxu0 %v1455
          %1673 = vmatprep.subr.bf16.mxu0 0
          %1674 = vmatpush1.bf16.msra.mxu0 %v1456
          %1675 = vmatprep.subr.bf16.mxu0 0
          %1676 = vmatpush1.bf16.msra.mxu0 %v1457
          %1677 = vmatprep.subr.bf16.mxu0 0
          %1678 = vmatpush1.bf16.msra.mxu0 %v1458
          %1679 = vmatprep.subr.bf16.mxu0 0
          %1680 = vmatpush1.bf16.msra.mxu0 %v1459
          %1681 = vmatprep.subr.bf16.mxu0 0
          %1682 = vmatpush1.bf16.msra.mxu0 %v1460
          %1683 = vmatprep.subr.bf16.mxu0 0
          %1684 = vmatpush1.bf16.msra.mxu0 %v1461
          %1685 = vmatprep.subr.bf16.mxu0 0
          %1686 = vmatpush1.bf16.msra.mxu0 %v1462
          %1687 = vmatprep.mubr.bf16.mxu0 %v1592
          %1688 = vmatmul.mubr.bf16.gmra.mrb[0].mxu0 %v1591
          %v1689 = vpop.f32.mrb[0].mxu0
          %v1690 = vadd.f32 0.0, %v1689
          %v1691 = vpop.f32.mrb[0].mxu0
          %v1692 = vpop.f32.mrb[0].mxu0
          %v1693 = vadd.f32 0.0, %v1692
          %v1694 = vpop.f32.mrb[0].mxu0
          %1695 = vmatprep.mubr.bf16.mxu0 %v1594
          %1696 = vmatmul.mubr.bf16.gmra.mrb[0].mxu0 %v1593
          %v1697 = vpop.f32.mrb[0].mxu0
          %v1698 = vadd.f32 0.0, %v1697
          %v1699 = vpop.f32.mrb[0].mxu0
          %v1700 = vpop.f32.mrb[0].mxu0
          %v1701 = vadd.f32 0.0, %v1700
          %v1702 = vpop.f32.mrb[0].mxu0
          %1703 = vmatprep.mubr.bf16.mxu0 %v1596
          %1704 = vmatmul.mubr.bf16.gmra.mrb[0].mxu0 %v1595
          %v1705 = vpop.f32.mrb[0].mxu0
          %v1706 = vadd.f32 0.0, %v1705
          %v1707 = vpop.f32.mrb[0].mxu0
          %v1708 = vpop.f32.mrb[0].mxu0
          %v1709 = vadd.f32 0.0, %v1708
          %v1710 = vpop.f32.mrb[0].mxu0
          %1711 = vmatprep.mubr.bf16.mxu0 %v1598
          %1712 = vmatmul.mubr.bf16.gmra.mrb[0].mxu0 %v1597
          %v1713 = vpop.f32.mrb[0].mxu0
          %v1714 = vadd.f32 0.0, %v1713
          %v1715 = vpop.f32.mrb[0].mxu0
          %v1716 = vpop.f32.mrb[0].mxu0
          %v1717 = vadd.f32 0.0, %v1716
          %v1718 = vpop.f32.mrb[0].mxu0
          %1719 = vmatprep.mubr.bf16.mxu0 %v1600
          %1720 = vmatmul.mubr.bf16.gmra.mrb[0].mxu0 %v1599
          %v1721 = vpop.f32.mrb[0].mxu0
          %v1722 = vadd.f32 0.0, %v1721
          %v1723 = vpop.f32.mrb[0].mxu0
          %v1724 = vpop.f32.mrb[0].mxu0
          %v1725 = vadd.f32 0.0, %v1724
          %v1726 = vpop.f32.mrb[0].mxu0
          %1727 = vmatprep.mubr.bf16.mxu0 %v1602
          %1728 = vmatmul.mubr.bf16.gmra.mrb[0].mxu0 %v1601
          %v1729 = vpop.f32.mrb[0].mxu0
          %v1730 = vadd.f32 0.0, %v1729
          %v1731 = vpop.f32.mrb[0].mxu0
          %v1732 = vpop.f32.mrb[0].mxu0
          %v1733 = vadd.f32 0.0, %v1732
          %v1734 = vpop.f32.mrb[0].mxu0
          %1735 = vmatprep.mubr.bf16.mxu0 %v1604
          %1736 = vmatmul.mubr.bf16.gmra.mrb[0].mxu0 %v1603
          %v1737 = vpop.f32.mrb[0].mxu0
          %v1738 = vadd.f32 0.0, %v1737
          %v1739 = vpop.f32.mrb[0].mxu0
          %v1740 = vpop.f32.mrb[0].mxu0
          %v1741 = vadd.f32 0.0, %v1740
          %v1742 = vpop.f32.mrb[0].mxu0
          %1743 = vmatprep.mubr.bf16.mxu0 %v1606
          %1744 = vmatmul.mubr.bf16.gmra.mrb[0].mxu0 %v1605
          %v1745 = vpop.f32.mrb[0].mxu0
          %v1746 = vadd.f32 0.0, %v1745
          %v1747 = vpop.f32.mrb[0].mxu0
          %v1748 = vpop.f32.mrb[0].mxu0
          %v1749 = vadd.f32 0.0, %v1748
          %v1750 = vpop.f32.mrb[0].mxu0
          %1751 = vmatprep.mubr.bf16.mxu0 %v1608
          %1752 = vmatmul.mubr.bf16.gmra.mrb[0].mxu0 %v1607
          %v1753 = vpop.f32.mrb[0].mxu0
          %v1754 = vadd.f32 0.0, %v1753
          %v1755 = vpop.f32.mrb[0].mxu0
          %v1756 = vpop.f32.mrb[0].mxu0
          %v1757 = vadd.f32 0.0, %v1756
          %v1758 = vpop.f32.mrb[0].mxu0
          %1759 = vmatprep.mubr.bf16.mxu0 %v1610
          %1760 = vmatmul.mubr.bf16.gmra.mrb[0].mxu0 %v1609
          %v1761 = vpop.f32.mrb[0].mxu0
          %v1762 = vadd.f32 0.0, %v1761
          %v1763 = vpop.f32.mrb[0].mxu0
          %v1764 = vpop.f32.mrb[0].mxu0
          %v1765 = vadd.f32 0.0, %v1764
          %v1766 = vpop.f32.mrb[0].mxu0
          %1767 = vmatprep.mubr.bf16.mxu0 %v1612
          %1768 = vmatmul.mubr.bf16.gmra.mrb[0].mxu0 %v1611
          %v1769 = vpop.f32.mrb[0].mxu0
          %v1770 = vadd.f32 0.0, %v1769
          %v1771 = vpop.f32.mrb[0].mxu0
          %v1772 = vpop.f32.mrb[0].mxu0
          %v1773 = vadd.f32 0.0, %v1772
          %v1774 = vpop.f32.mrb[0].mxu0
          %1775 = vmatprep.mubr.bf16.mxu0 %v1614
          %1776 = vmatmul.mubr.bf16.gmra.mrb[0].mxu0 %v1613
          %v1777 = vpop.f32.mrb[0].mxu0
          %v1778 = vadd.f32 0.0, %v1777
          %v1779 = vpop.f32.mrb[0].mxu0
          %v1780 = vpop.f32.mrb[0].mxu0
          %v1781 = vadd.f32 0.0, %v1780
          %v1782 = vpop.f32.mrb[0].mxu0
          %1783 = vmatprep.mubr.bf16.mxu0 %v1616
          %1784 = vmatmul.mubr.bf16.gmra.mrb[0].mxu0 %v1615
          %v1785 = vpop.f32.mrb[0].mxu0
          %v1786 = vadd.f32 0.0, %v1785
          %v1787 = vpop.f32.mrb[0].mxu0
          %v1788 = vpop.f32.mrb[0].mxu0
          %v1789 = vadd.f32 0.0, %v1788
          %v1790 = vpop.f32.mrb[0].mxu0
          %1791 = vmatprep.mubr.bf16.mxu0 %v1618
          %1792 = vmatmul.mubr.bf16.gmra.mrb[0].mxu0 %v1617
          %v1793 = vpop.f32.mrb[0].mxu0
          %v1794 = vadd.f32 0.0, %v1793
          %v1795 = vpop.f32.mrb[0].mxu0
          %v1796 = vpop.f32.mrb[0].mxu0
          %v1797 = vadd.f32 0.0, %v1796
          %v1798 = vpop.f32.mrb[0].mxu0
          %1799 = vmatprep.mubr.bf16.mxu0 %v1620
          %1800 = vmatmul.mubr.bf16.gmra.mrb[0].mxu0 %v1619
          %v1801 = vpop.f32.mrb[0].mxu0
          %v1802 = vadd.f32 0.0, %v1801
          %v1803 = vpop.f32.mrb[0].mxu0
          %v1804 = vpop.f32.mrb[0].mxu0
          %v1805 = vadd.f32 0.0, %v1804
          %v1806 = vpop.f32.mrb[0].mxu0
          %1807 = vmatprep.mubr.bf16.mxu0 %v1622
          %1808 = vmatmul.mubr.bf16.gmra.mrb[0].mxu0 %v1621
          %v1809 = vpop.f32.mrb[0].mxu0
          %v1810 = vadd.f32 0.0, %v1809
          %v1811 = vpop.f32.mrb[0].mxu0
          %v1812 = vpop.f32.mrb[0].mxu0
          %v1813 = vadd.f32 0.0, %v1812
          %v1814 = vpop.f32.mrb[0].mxu0
          %1815 = vdwg.mxu0
          %v1816 = vmax.f32 %v1690, 0.0
          %v1817 = vmax.f32 %v1693, 0.0
          %v1818 = vmax.f32 %v1698, 0.0
          %v1819 = vmax.f32 %v1701, 0.0
          %v1820 = vmax.f32 %v1706, 0.0
          %v1821 = vmax.f32 %v1709, 0.0
          %v1822 = vmax.f32 %v1714, 0.0
          %v1823 = vmax.f32 %v1717, 0.0
          %v1824 = vmax.f32 %v1722, 0.0
          %v1825 = vmax.f32 %v1725, 0.0
          %v1826 = vmax.f32 %v1730, 0.0
          %v1827 = vmax.f32 %v1733, 0.0
          %v1828 = vmax.f32 %v1738, 0.0
          %v1829 = vmax.f32 %v1741, 0.0
          %v1830 = vmax.f32 %v1746, 0.0
          %v1831 = vmax.f32 %v1749, 0.0
          %v1832 = vmax.f32 %v1754, 0.0
          %v1833 = vmax.f32 %v1757, 0.0
          %v1834 = vmax.f32 %v1762, 0.0
          %v1835 = vmax.f32 %v1765, 0.0
          %v1836 = vmax.f32 %v1770, 0.0
          %v1837 = vmax.f32 %v1773, 0.0
          %v1838 = vmax.f32 %v1778, 0.0
          %v1839 = vmax.f32 %v1781, 0.0
          %v1840 = vmax.f32 %v1786, 0.0
          %v1841 = vmax.f32 %v1789, 0.0
          %v1842 = vmax.f32 %v1794, 0.0
          %v1843 = vmax.f32 %v1797, 0.0
          %v1844 = vmax.f32 %v1802, 0.0
          %v1845 = vmax.f32 %v1805, 0.0
          %v1846 = vmax.f32 %v1810, 0.0
          %v1847 = vmax.f32 %v1813, 0.0
          %v1848 = vpack.c.bf16 %v1817, %v1816
          %v1849 = vpack.c.bf16 %v1833, %v1832
          %v1850 = vpack.c.bf16 %v1819, %v1818
          %v1851 = vpack.c.bf16 %v1835, %v1834
          %v1852 = vpack.c.bf16 %v1821, %v1820
          %v1853 = vpack.c.bf16 %v1837, %v1836
          %v1854 = vpack.c.bf16 %v1823, %v1822
          %v1855 = vpack.c.bf16 %v1839, %v1838
          %v1856 = vpack.c.bf16 %v1825, %v1824
          %v1857 = vpack.c.bf16 %v1841, %v1840
          %v1858 = vpack.c.bf16 %v1827, %v1826
          %v1859 = vpack.c.bf16 %v1843, %v1842
          %v1860 = vpack.c.bf16 %v1829, %v1828
          %v1861 = vpack.c.bf16 %v1845, %v1844
          %v1862 = vpack.c.bf16 %v1831, %v1830
          %v1863 = vpack.c.bf16 %v1847, %v1846
          %v1864 = vld [vmem:[#allocation9 + $0x60] sm:$0xf]
          %v1865 = vld [vmem:[#allocation9 + $0x64] sm:$0xf]
          %v1866 = vld [vmem:[#allocation9 + $0x68] sm:$0xf]
          %v1867 = vld [vmem:[#allocation9 + $0x6c] sm:$0xf]
          %v1868 = vld [vmem:[#allocation9 + $0x70] sm:$0xf]
          %v1869 = vld [vmem:[#allocation9 + $0x74] sm:$0xf]
          %v1870 = vld [vmem:[#allocation9 + $0x78] sm:$0xf]
          %v1871 = vld [vmem:[#allocation9 + $0x7c] sm:$0xf]
          %v1872 = vld [vmem:[#allocation9 + $0x80] sm:$0xf]
          %v1873 = vld [vmem:[#allocation9 + $0x84] sm:$0xf]
          %v1874 = vld [vmem:[#allocation9 + $0x88] sm:$0xf]
          %v1875 = vld [vmem:[#allocation9 + $0x8c] sm:$0xf]
          %v1876 = vld [vmem:[#allocation9 + $0x90] sm:$0xf]
          %v1877 = vld [vmem:[#allocation9 + $0x94] sm:$0xf]
          %v1878 = vld [vmem:[#allocation9 + $0x98] sm:$0xf]
          %v1879 = vld [vmem:[#allocation9 + $0x9c] sm:$0xf]
          %v1880 = vld [vmem:[#allocation9 + $0xa0] sm:$0xf]
          %v1881 = vld [vmem:[#allocation9 + $0xa4] sm:$0xf]
          %v1882 = vld [vmem:[#allocation9 + $0xa8] sm:$0xf]
          %v1883 = vld [vmem:[#allocation9 + $0xac] sm:$0xf]
          %v1884 = vld [vmem:[#allocation9 + $0xb0] sm:$0xf]
          %v1885 = vld [vmem:[#allocation9 + $0xb4] sm:$0xf]
          %v1886 = vld [vmem:[#allocation9 + $0xb8] sm:$0xf]
          %v1887 = vld [vmem:[#allocation9 + $0xbc] sm:$0xf]
          %v1888 = vld [vmem:[#allocation9 + $0xc0] sm:$0xf]
          %v1889 = vld [vmem:[#allocation9 + $0xc4] sm:$0xf]
          %v1890 = vld [vmem:[#allocation9 + $0xc8] sm:$0xf]
          %v1891 = vld [vmem:[#allocation9 + $0xcc] sm:$0xf]
          %v1892 = vld [vmem:[#allocation9 + $0xd0] sm:$0xf]
          %v1893 = vld [vmem:[#allocation9 + $0xd4] sm:$0xf]
          %v1894 = vld [vmem:[#allocation9 + $0xd8] sm:$0xf]
          %v1895 = vld [vmem:[#allocation9 + $0xdc] sm:$0xf]
          %v1928 = vunpack.c.l.b16 %v1864
          %v1929 = vunpack.c.l.b16 %v1865
          %v1930 = vunpack.c.l.b16 %v1866
          %v1931 = vunpack.c.l.b16 %v1867
          %v1932 = vunpack.c.l.b16 %v1868
          %v1933 = vunpack.c.l.b16 %v1869
          %v1934 = vunpack.c.l.b16 %v1870
          %v1935 = vunpack.c.l.b16 %v1871
          %v1936 = vunpack.c.l.b16 %v1872
          %v1937 = vunpack.c.l.b16 %v1873
          %v1938 = vunpack.c.l.b16 %v1874
          %v1939 = vunpack.c.l.b16 %v1875
          %v1940 = vunpack.c.l.b16 %v1876
          %v1941 = vunpack.c.l.b16 %v1877
          %v1942 = vunpack.c.l.b16 %v1878
          %v1943 = vunpack.c.l.b16 %v1879
          %v1944 = vunpack.c.l.b16 %v1880
          %v1945 = vunpack.c.l.b16 %v1881
          %v1946 = vunpack.c.l.b16 %v1882
          %v1947 = vunpack.c.l.b16 %v1883
          %v1948 = vunpack.c.l.b16 %v1884
          %v1949 = vunpack.c.l.b16 %v1885
          %v1950 = vunpack.c.l.b16 %v1886
          %v1951 = vunpack.c.l.b16 %v1887
          %v1952 = vunpack.c.l.b16 %v1888
          %v1953 = vunpack.c.l.b16 %v1889
          %v1954 = vunpack.c.l.b16 %v1890
          %v1955 = vunpack.c.l.b16 %v1891
          %v1956 = vunpack.c.l.b16 %v1892
          %v1957 = vunpack.c.l.b16 %v1893
          %v1958 = vunpack.c.l.b16 %v1894
          %v1959 = vunpack.c.l.b16 %v1895
          %v1960 = vpack.c.b16 %v1929, %v1928
          %v1961 = vpack.c.b16 %v1931, %v1930
          %v1962 = vpack.c.b16 %v1933, %v1932
          %v1963 = vpack.c.b16 %v1935, %v1934
          %v1964 = vpack.c.b16 %v1937, %v1936
          %v1965 = vpack.c.b16 %v1939, %v1938
          %v1966 = vpack.c.b16 %v1941, %v1940
          %v1967 = vpack.c.b16 %v1943, %v1942
          %v1968 = vpack.c.b16 %v1945, %v1944
          %v1969 = vpack.c.b16 %v1947, %v1946
          %v1970 = vpack.c.b16 %v1949, %v1948
          %v1971 = vpack.c.b16 %v1951, %v1950
          %v1972 = vpack.c.b16 %v1953, %v1952
          %v1973 = vpack.c.b16 %v1955, %v1954
          %v1974 = vpack.c.b16 %v1957, %v1956
          %v1975 = vpack.c.b16 %v1959, %v1958
          %1992 = vmatprep.subr.bf16.mxu0 0
          %1993 = vmatpush1.bf16.msra.mxu0 %v1960
          %1994 = vmatprep.subr.bf16.mxu0 0
          %1995 = vmatpush1.bf16.msra.mxu0 %v1961
          %1996 = vmatprep.subr.bf16.mxu0 0
          %1997 = vmatpush1.bf16.msra.mxu0 %v1962
          %1998 = vmatprep.subr.bf16.mxu0 0
          %1999 = vmatpush1.bf16.msra.mxu0 %v1963
          %2000 = vmatprep.subr.bf16.mxu0 0
          %2001 = vmatpush1.bf16.msra.mxu0 %v1964
          %2002 = vmatprep.subr.bf16.mxu0 0
          %2003 = vmatpush1.bf16.msra.mxu0 %v1965
          %2004 = vmatprep.subr.bf16.mxu0 0
          %2005 = vmatpush1.bf16.msra.mxu0 %v1966
          %2006 = vmatprep.subr.bf16.mxu0 0
          %2007 = vmatpush1.bf16.msra.mxu0 %v1967
          %2008 = vmatprep.subr.bf16.mxu0 0
          %2009 = vmatpush1.bf16.msra.mxu0 %v1968
          %2010 = vmatprep.subr.bf16.mxu0 0
          %2011 = vmatpush1.bf16.msra.mxu0 %v1969
          %2012 = vmatprep.subr.bf16.mxu0 0
          %2013 = vmatpush1.bf16.msra.mxu0 %v1970
          %2014 = vmatprep.subr.bf16.mxu0 0
          %2015 = vmatpush1.bf16.msra.mxu0 %v1971
          %2016 = vmatprep.subr.bf16.mxu0 0
          %2017 = vmatpush1.bf16.msra.mxu0 %v1972
          %2018 = vmatprep.subr.bf16.mxu0 0
          %2019 = vmatpush1.bf16.msra.mxu0 %v1973
          %2020 = vmatprep.subr.bf16.mxu0 0
          %2021 = vmatpush1.bf16.msra.mxu0 %v1974
          %2022 = vmatprep.subr.bf16.mxu0 0
          %2023 = vmatpush1.bf16.msra.mxu0 %v1975
          %2024 = vmatprep.mubr.bf16.mxu0 %v1849
          %2025 = vmatmul.mubr.bf16.gmra.mrb[0].mxu0 %v1848
          %v2026 = vpop.f32.mrb[0].mxu0
          %v2027 = vadd.f32 0.0, %v2026
          %v2028 = vpop.f32.mrb[0].mxu0
          %v2029 = vpop.f32.mrb[0].mxu0
          %v2030 = vadd.f32 0.0, %v2029
          %v2031 = vpop.f32.mrb[0].mxu0
          %2032 = vmatprep.mubr.bf16.mxu0 %v1851
          %2033 = vmatmul.mubr.bf16.gmra.mrb[0].mxu0 %v1850
          %v2034 = vpop.f32.mrb[0].mxu0
          %v2035 = vadd.f32 0.0, %v2034
          %v2036 = vpop.f32.mrb[0].mxu0
          %v2037 = vpop.f32.mrb[0].mxu0
          %v2038 = vadd.f32 0.0, %v2037
          %v2039 = vpop.f32.mrb[0].mxu0
          %2040 = vmatprep.mubr.bf16.mxu0 %v1853
          %2041 = vmatmul.mubr.bf16.gmra.mrb[0].mxu0 %v1852
          %v2042 = vpop.f32.mrb[0].mxu0
          %v2043 = vadd.f32 0.0, %v2042
          %v2044 = vpop.f32.mrb[0].mxu0
          %v2045 = vpop.f32.mrb[0].mxu0
          %v2046 = vadd.f32 0.0, %v2045
          %v2047 = vpop.f32.mrb[0].mxu0
          %2048 = vmatprep.mubr.bf16.mxu0 %v1855
          %2049 = vmatmul.mubr.bf16.gmra.mrb[0].mxu0 %v1854
          %v2050 = vpop.f32.mrb[0].mxu0
          %v2051 = vadd.f32 0.0, %v2050
          %v2052 = vpop.f32.mrb[0].mxu0
          %v2053 = vpop.f32.mrb[0].mxu0
          %v2054 = vadd.f32 0.0, %v2053
          %v2055 = vpop.f32.mrb[0].mxu0
          %2056 = vmatprep.mubr.bf16.mxu0 %v1857
          %2057 = vmatmul.mubr.bf16.gmra.mrb[0].mxu0 %v1856
          %v2058 = vpop.f32.mrb[0].mxu0
          %v2059 = vadd.f32 0.0, %v2058
          %v2060 = vpop.f32.mrb[0].mxu0
          %v2061 = vpop.f32.mrb[0].mxu0
          %v2062 = vadd.f32 0.0, %v2061
          %v2063 = vpop.f32.mrb[0].mxu0
          %2064 = vmatprep.mubr.bf16.mxu0 %v1859
          %2065 = vmatmul.mubr.bf16.gmra.mrb[0].mxu0 %v1858
          %v2066 = vpop.f32.mrb[0].mxu0
          %v2067 = vadd.f32 0.0, %v2066
          %v2068 = vpop.f32.mrb[0].mxu0
          %v2069 = vpop.f32.mrb[0].mxu0
          %v2070 = vadd.f32 0.0, %v2069
          %v2071 = vpop.f32.mrb[0].mxu0
          %2072 = vmatprep.mubr.bf16.mxu0 %v1861
          %2073 = vmatmul.mubr.bf16.gmra.mrb[0].mxu0 %v1860
          %v2074 = vpop.f32.mrb[0].mxu0
          %v2075 = vadd.f32 0.0, %v2074
          %v2076 = vpop.f32.mrb[0].mxu0
          %v2077 = vpop.f32.mrb[0].mxu0
          %v2078 = vadd.f32 0.0, %v2077
          %v2079 = vpop.f32.mrb[0].mxu0
          %2080 = vmatprep.mubr.bf16.mxu0 %v1863
          %2081 = vmatmul.mubr.bf16.gmra.mrb[0].mxu0 %v1862
          %v2082 = vpop.f32.mrb[0].mxu0
          %v2083 = vadd.f32 0.0, %v2082
          %v2084 = vpop.f32.mrb[0].mxu0
          %v2085 = vpop.f32.mrb[0].mxu0
          %v2086 = vadd.f32 0.0, %v2085
          %v2087 = vpop.f32.mrb[0].mxu0
          %2088 = vdwg.mxu0
          %s2089 = scalar_lea.vmem [#allocation10], %s290
          %v2090 = vld [vmem:[%s2089] sm:$0xff]
          %v2091 = vld [vmem:[%s2089 + $0x8] sm:$0xff]
          %v2092 = vld [vmem:[%s2089 + $0x10] sm:$0xff]
          %v2093 = vld [vmem:[%s2089 + $0x18] sm:$0xff]
          %v2094 = vld [vmem:[%s2089 + $0x20] sm:$0xff]
          %v2095 = vld [vmem:[%s2089 + $0x28] sm:$0xff]
          %v2096 = vld [vmem:[%s2089 + $0x30] sm:$0xff]
          %v2097 = vld [vmem:[%s2089 + $0x38] sm:$0xff]
          %v2098 = vld [vmem:[%s2089 + $0x40] sm:$0xff]
          %v2099 = vld [vmem:[%s2089 + $0x48] sm:$0xff]
          %v2100 = vld [vmem:[%s2089 + $0x50] sm:$0xff]
          %v2101 = vld [vmem:[%s2089 + $0x58] sm:$0xff]
          %v2102 = vld [vmem:[%s2089 + $0x60] sm:$0xff]
          %v2103 = vld [vmem:[%s2089 + $0x68] sm:$0xff]
          %v2104 = vld [vmem:[%s2089 + $0x70] sm:$0xff]
          %v2105 = vld [vmem:[%s2089 + $0x78] sm:$0xff]
          %v2106 = vadd.f32 %v2090, %v2027
          %v2107 = vadd.f32 %v2091, %v2030
          %v2108 = vadd.f32 %v2092, %v2035
          %v2109 = vadd.f32 %v2093, %v2038
          %v2110 = vadd.f32 %v2094, %v2043
          %v2111 = vadd.f32 %v2095, %v2046
          %v2112 = vadd.f32 %v2096, %v2051
          %v2113 = vadd.f32 %v2097, %v2054
          %v2114 = vadd.f32 %v2098, %v2059
          %v2115 = vadd.f32 %v2099, %v2062
          %v2116 = vadd.f32 %v2100, %v2067
          %v2117 = vadd.f32 %v2101, %v2070
          %v2118 = vadd.f32 %v2102, %v2075
          %v2119 = vadd.f32 %v2103, %v2078
          %v2120 = vadd.f32 %v2104, %v2083
          %v2121 = vadd.f32 %v2105, %v2086
          %v2122 = vlaneseq
          %v2123 = vand.u32 %v2122, 127
          %vm2124 = vcmp.lt.s32.totalorder %v2123, 4
          %v2125 = vsel %vm2124, %v2106, -1e+30
          %v2126 = vsel %vm2124, %v2107, -1e+30
          %v2127 = vsel %vm2124, %v2108, -1e+30
          %v2128 = vsel %vm2124, %v2109, -1e+30
          %v2129 = vsel %vm2124, %v2110, -1e+30
          %v2130 = vsel %vm2124, %v2111, -1e+30
          %v2131 = vsel %vm2124, %v2112, -1e+30
          %v2132 = vsel %vm2124, %v2113, -1e+30
          %v2133 = vsel %vm2124, %v2114, -1e+30
          %v2134 = vsel %vm2124, %v2115, -1e+30
          %v2135 = vsel %vm2124, %v2116, -1e+30
          %v2136 = vsel %vm2124, %v2117, -1e+30
          %v2137 = vsel %vm2124, %v2118, -1e+30
          %v2138 = vsel %vm2124, %v2119, -1e+30
          %v2139 = vsel %vm2124, %v2120, -1e+30
          %v2140 = vsel %vm2124, %v2121, -1e+30
          %2141 = vmax.xlane.f32.xlu0 %v2125
          %v2142 = vpop.xlane.xlu0 %2141
          %2143 = vmax.xlane.f32.xlu0 %v2126
          %v2144 = vpop.xlane.xlu0 %2143
          %2145 = vmax.xlane.f32.xlu0 %v2127
          %v2146 = vpop.xlane.xlu0 %2145
          %2147 = vmax.xlane.f32.xlu0 %v2128
          %v2148 = vpop.xlane.xlu0 %2147
          %2149 = vmax.xlane.f32.xlu0 %v2129
          %v2150 = vpop.xlane.xlu0 %2149
          %2151 = vmax.xlane.f32.xlu0 %v2130
          %v2152 = vpop.xlane.xlu0 %2151
          %2153 = vmax.xlane.f32.xlu0 %v2131
          %v2154 = vpop.xlane.xlu0 %2153
          %2155 = vmax.xlane.f32.xlu0 %v2132
          %v2156 = vpop.xlane.xlu0 %2155
          %2157 = vmax.xlane.f32.xlu0 %v2133
          %v2158 = vpop.xlane.xlu0 %2157
          %2159 = vmax.xlane.f32.xlu0 %v2134
          %v2160 = vpop.xlane.xlu0 %2159
          %2161 = vmax.xlane.f32.xlu0 %v2135
          %v2162 = vpop.xlane.xlu0 %2161
          %2163 = vmax.xlane.f32.xlu0 %v2136
          %v2164 = vpop.xlane.xlu0 %2163
          %2165 = vmax.xlane.f32.xlu0 %v2137
          %v2166 = vpop.xlane.xlu0 %2165
          %2167 = vmax.xlane.f32.xlu0 %v2138
          %v2168 = vpop.xlane.xlu0 %2167
          %2169 = vmax.xlane.f32.xlu0 %v2139
          %v2170 = vpop.xlane.xlu0 %2169
          %2171 = vmax.xlane.f32.xlu0 %v2140
          %v2172 = vpop.xlane.xlu0 %2171
          %v2173 = vsub.f32 %v2125, %v2142
          %v2174 = vsub.f32 %v2126, %v2144
          %v2175 = vsub.f32 %v2127, %v2146
          %v2176 = vsub.f32 %v2128, %v2148
          %v2177 = vsub.f32 %v2129, %v2150
          %v2178 = vsub.f32 %v2130, %v2152
          %v2179 = vsub.f32 %v2131, %v2154
          %v2180 = vsub.f32 %v2132, %v2156
          %v2181 = vsub.f32 %v2133, %v2158
          %v2182 = vsub.f32 %v2134, %v2160
          %v2183 = vsub.f32 %v2135, %v2162
          %v2184 = vsub.f32 %v2136, %v2164
          %v2185 = vsub.f32 %v2137, %v2166
          %v2186 = vsub.f32 %v2138, %v2168
          %v2187 = vsub.f32 %v2139, %v2170
          %v2188 = vsub.f32 %v2140, %v2172
          %v2189 = vmul.f32 %v2173, 1.442695
          %v2190 = vpow.pop %v2189
          %v2191 = vmul.f32 %v2174, 1.442695
          %v2192 = vpow.pop %v2191
          %v2193 = vmul.f32 %v2175, 1.442695
          %v2194 = vpow.pop %v2193
          %v2195 = vmul.f32 %v2176, 1.442695
          %v2196 = vpow.pop %v2195
          %v2197 = vmul.f32 %v2177, 1.442695
          %v2198 = vpow.pop %v2197
          %v2199 = vmul.f32 %v2178, 1.442695
          %v2200 = vpow.pop %v2199
          %v2201 = vmul.f32 %v2179, 1.442695
          %v2202 = vpow.pop %v2201
          %v2203 = vmul.f32 %v2180, 1.442695
          %v2204 = vpow.pop %v2203
          %v2205 = vmul.f32 %v2181, 1.442695
          %v2206 = vpow.pop %v2205
          %v2207 = vmul.f32 %v2182, 1.442695
          %v2208 = vpow.pop %v2207
          %v2209 = vmul.f32 %v2183, 1.442695
          %v2210 = vpow.pop %v2209
          %v2211 = vmul.f32 %v2184, 1.442695
          %v2212 = vpow.pop %v2211
          %v2213 = vmul.f32 %v2185, 1.442695
          %v2214 = vpow.pop %v2213
          %v2215 = vmul.f32 %v2186, 1.442695
          %v2216 = vpow.pop %v2215
          %v2217 = vmul.f32 %v2187, 1.442695
          %v2218 = vpow.pop %v2217
          %v2219 = vmul.f32 %v2188, 1.442695
          %v2220 = vpow.pop %v2219
          %2221 = vadd.xlane.f32.xlu0 %v2190
          %v2222 = vpop.xlane.xlu0 %2221
          %2223 = vadd.xlane.f32.xlu0 %v2192
          %v2224 = vpop.xlane.xlu0 %2223
          %2225 = vadd.xlane.f32.xlu0 %v2194
          %v2226 = vpop.xlane.xlu0 %2225
          %2227 = vadd.xlane.f32.xlu0 %v2196
          %v2228 = vpop.xlane.xlu0 %2227
          %2229 = vadd.xlane.f32.xlu0 %v2198
          %v2230 = vpop.xlane.xlu0 %2229
          %2231 = vadd.xlane.f32.xlu0 %v2200
          %v2232 = vpop.xlane.xlu0 %2231
          %2233 = vadd.xlane.f32.xlu0 %v2202
          %v2234 = vpop.xlane.xlu0 %2233
          %2235 = vadd.xlane.f32.xlu0 %v2204
          %v2236 = vpop.xlane.xlu0 %2235
          %2237 = vadd.xlane.f32.xlu0 %v2206
          %v2238 = vpop.xlane.xlu0 %2237
          %2239 = vadd.xlane.f32.xlu0 %v2208
          %v2240 = vpop.xlane.xlu0 %2239
          %2241 = vadd.xlane.f32.xlu0 %v2210
          %v2242 = vpop.xlane.xlu0 %2241
          %2243 = vadd.xlane.f32.xlu0 %v2212
          %v2244 = vpop.xlane.xlu0 %2243
          %2245 = vadd.xlane.f32.xlu0 %v2214
          %v2246 = vpop.xlane.xlu0 %2245
          %2247 = vadd.xlane.f32.xlu0 %v2216
          %v2248 = vpop.xlane.xlu0 %2247
          %2249 = vadd.xlane.f32.xlu0 %v2218
          %v2250 = vpop.xlane.xlu0 %2249
          %2251 = vadd.xlane.f32.xlu0 %v2220
          %v2252 = vpop.xlane.xlu0 %2251
          %v2253 = vrcp.pop %v2222
          %v2254 = vrcp.pop %v2224
          %v2255 = vrcp.pop %v2226
          %v2256 = vrcp.pop %v2228
          %v2257 = vrcp.pop %v2230
          %v2258 = vrcp.pop %v2232
          %v2259 = vrcp.pop %v2234
          %v2260 = vrcp.pop %v2236
          %v2261 = vrcp.pop %v2238
          %v2262 = vrcp.pop %v2240
          %v2263 = vrcp.pop %v2242
          %v2264 = vrcp.pop %v2244
          %v2265 = vrcp.pop %v2246
          %v2266 = vrcp.pop %v2248
          %v2267 = vrcp.pop %v2250
          %v2268 = vrcp.pop %v2252
          %v2269 = vmul.f32 %v2190, %v2253
          %v2270 = vmul.f32 %v2192, %v2254
          %v2271 = vmul.f32 %v2194, %v2255
          %v2272 = vmul.f32 %v2196, %v2256
          %v2273 = vmul.f32 %v2198, %v2257
          %v2274 = vmul.f32 %v2200, %v2258
          %v2275 = vmul.f32 %v2202, %v2259
          %v2276 = vmul.f32 %v2204, %v2260
          %v2277 = vmul.f32 %v2206, %v2261
          %v2278 = vmul.f32 %v2208, %v2262
          %v2279 = vmul.f32 %v2210, %v2263
          %v2280 = vmul.f32 %v2212, %v2264
          %v2281 = vmul.f32 %v2214, %v2265
          %v2282 = vmul.f32 %v2216, %v2266
          %v2283 = vmul.f32 %v2218, %v2267
          %v2284 = vmul.f32 %v2220, %v2268
          %2285 = vst [vmem:[%s2089] sm:$0xff] %v2269
          %2286 = vst [vmem:[%s2089 + $0x8] sm:$0xff] %v2270
          %2287 = vst [vmem:[%s2089 + $0x10] sm:$0xff] %v2271
          %2288 = vst [vmem:[%s2089 + $0x18] sm:$0xff] %v2272
          %2289 = vst [vmem:[%s2089 + $0x20] sm:$0xff] %v2273
          %2290 = vst [vmem:[%s2089 + $0x28] sm:$0xff] %v2274
          %2291 = vst [vmem:[%s2089 + $0x30] sm:$0xff] %v2275
          %2292 = vst [vmem:[%s2089 + $0x38] sm:$0xff] %v2276
          %2293 = vst [vmem:[%s2089 + $0x40] sm:$0xff] %v2277
          %2294 = vst [vmem:[%s2089 + $0x48] sm:$0xff] %v2278
          %2295 = vst [vmem:[%s2089 + $0x50] sm:$0xff] %v2279
          %2296 = vst [vmem:[%s2089 + $0x58] sm:$0xff] %v2280
          %2297 = vst [vmem:[%s2089 + $0x60] sm:$0xff] %v2281
          %2298 = vst [vmem:[%s2089 + $0x68] sm:$0xff] %v2282
          %2299 = vst [vmem:[%s2089 + $0x70] sm:$0xff] %v2283
          %2300 = vst [vmem:[%s2089 + $0x78] sm:$0xff] %v2284
        $region60: #{tpu_custom_call.1} parent=35 // pred_fallthru
          _
        // Predicated region
        $region61: #{tpu_custom_call.1} parent=35 // pred_check
          %p2301 = pneg %p149
        $region62: #{tpu_custom_call.1} parent=35 // pred_check_branch
          %2303 = sbr.rel (%p2301) target = $region64
        $region63: #{tpu_custom_call.1} parent=35 // pred_region
          %s2305 = ssub.s32 4096, 4096
          %2306 = vsyncadd [#allocation6], %s2305
          %s2307 = sshll.u32 [#allocation10], 4
          %s2308 = int_to_ptr.vmem [resolvable:$true] %s2307
          %2313 = dma.vmem_to_hbm [thread:$0]  %s2308, 4096, %s4, [#allocation6], 128, 128, 8
        $region64: #{tpu_custom_call.1} parent=35 // pred_fallthru
          _
        // Predicated region
        $region65: #{tpu_custom_call.1} parent=35 // pred_check
          %p2314 = pneg %p149
        $region66: #{tpu_custom_call.1} parent=35 // pred_check_branch
          %2316 = sbr.rel (%p2314) target = $region68
        $region67: #{tpu_custom_call.1} parent=35 // pred_region
          %2317 = dma.done [#allocation6], 4096
        $region68: #{tpu_custom_call.1} parent=35 // pred_fallthru
          _
      $region36: #{tpu_custom_call.1} parent=5 // pred_fallthru
        _
      %p2318 = scmp.le.s32.totalorder 2, %s17
      // Predicated region
      $region69: #{tpu_custom_call.1} parent=5 // pred_check
        %p2319 = pneg %p2318
      $region70: #{tpu_custom_call.1} parent=5 // pred_check_branch
        %2321 = sbr.rel (%p2319) target = $region72
      $region71: #{tpu_custom_call.1} parent=5 // pred_region
        %s2322 = ssub.s32 %s17, 2
      $region72: #{tpu_custom_call.1} parent=5 // pred_fallthru
        _
    $region6: #{tpu_custom_call.1} parent=1 // loop_footer
      %s21 = sadd.s32 1, %s17
    $region7: #{tpu_custom_call.1} parent=1 // loop_footer_branch
      %16 = sbr.rel target = $region3
    $region8: #{tpu_custom_call.1} parent=1 // loop_exit
      _
    %2323 = vsyncpa [#allocation5], 1
    %s2324 = scalar_lea.sflag [#allocation5], 1
    %2325 = vsyncpa %s2324, 1
    %2326 = vsyncpa [#allocation8], 1
    %s2327 = scalar_lea.sflag [#allocation8], 1
    %2328 = vsyncpa %s2327, 1
    %2329 = vsyncpa [#allocation6], 1
    %s2330 = scalar_lea.sflag [#allocation6], 1
    %2331 = vsyncpa %s2330, 1

</llo_original>
